<compile_context>
chip_gen: v7x
topology: tpu7x:2x2x1
jax: 0.10.0
libtpu: 0.0.40
codegen_flags: <defaults>
</compile_context>

<pallas_src>
import functools

import jax
import jax.numpy as jnp
from jax import lax
from jax.experimental import pallas as pl
from jax.experimental.pallas import tpu as pltpu


def _round_up(x, m):
    return (x + m - 1) // m * m


def _pad_gates(w, in_pad, hidden, hidden_pad):
    """Pad a (in_dim, 4*hidden) gate-stacked matrix to (in_pad, 4*hidden_pad).

    Each of the 4 PyTorch gate blocks [i, f, g, o] is padded independently so
    that, in the padded layout, gate k occupies lanes [k*hidden_pad,
    (k+1)*hidden_pad) — lane-aligned static slices inside the kernel.
    """
    in_dim = w.shape[0]
    gates = jnp.split(w, 4, axis=1)
    gates = [jnp.pad(g, ((0, in_pad - in_dim), (0, hidden_pad - hidden)))
             for g in gates]
    return jnp.concatenate(gates, axis=1)


def _lstm_cls_kernel(x_ref,        # (Tc, Bp, Ep)   embedded chunk, time-major
                     wih_ref,      # (Ep, 4Hp)
                     whh_ref,      # (Hp, 4Hp)
                     b_ref,        # (1, 4Hp)       b_ih + b_hh combined
                     wcls_ref,     # (Hp, Lp)
                     bcls_ref,     # (1, Lp)
                     out_ref,      # (Bp, Lp)       classifier logits
                     h_scr,        # (Bp, Hp)       hidden state (persists)
                     c_scr,        # (Bp, Hp)       cell state (persists)
                     zx_scr,       # (Tc, Bp, 4Hp)  hoisted x-projection
                     *, seq_len, chunk, hidden_pad, mask_tail):
    ci = pl.program_id(0)
    tc, bp, ep = x_ref.shape
    hp = hidden_pad

    @pl.when(ci == 0)
    def _init():
        h_scr[...] = jnp.zeros_like(h_scr)
        c_scr[...] = jnp.zeros_like(c_scr)

    # Hoisted input projection: one dense (Tc*Bp, Ep) @ (Ep, 4Hp) MXU matmul
    # per chunk instead of a (Bp, Ep) sliver per timestep.
    x_flat = x_ref[...].reshape(tc * bp, ep)
    zx = jnp.dot(x_flat, wih_ref[...], preferred_element_type=jnp.float32)
    zx_scr[...] = zx.reshape(tc, bp, 4 * hp)

    # Bias broadcast hoisted out of the recurrence (JAX does not CSE
    # broadcast_in_dim inside the loop).
    b_bcast = jnp.broadcast_to(b_ref[...], (bp, 4 * hp))

    def step(t, carry):
        h, c = carry
        z = (zx_scr[t]
             + jnp.dot(h, whh_ref[...], preferred_element_type=jnp.float32)
             + b_bcast)
        # PyTorch gate order [i, f, g, o]; slices are lane-aligned (hp % 128 == 0).
        i_g = jax.nn.sigmoid(z[:, 0 * hp:1 * hp])
        f_g = jax.nn.sigmoid(z[:, 1 * hp:2 * hp])
        g_g = jnp.tanh(z[:, 2 * hp:3 * hp])
        o_g = jax.nn.sigmoid(z[:, 3 * hp:4 * hp])
        c_new = f_g * c + i_g * g_g
        h_new = o_g * jnp.tanh(c_new)
        if mask_tail:  # static: only emitted when the padded tail exists
            valid = (ci * chunk + t) < seq_len
            h_new = jnp.where(valid, h_new, h)
            c_new = jnp.where(valid, c_new, c)
        return h_new, c_new

    h, c = lax.fori_loop(0, tc, step, (h_scr[...], c_scr[...]),
                         unroll=min(tc, 8))
    h_scr[...] = h
    c_scr[...] = c

    @pl.when(ci == pl.num_programs(0) - 1)
    def _finalize():
        out_ref[...] = (
            jnp.dot(h, wcls_ref[...], preferred_element_type=jnp.float32)
            + bcls_ref[...])


def lstm_classifier(batch_input_ids, params, *, chunk=None):
    """Forward pass matching Model.forward.  Returns (batch, label_nums) f32."""
    emb_table = params["emb"]                    # (V, E)
    w_ih = params["w_ih"]                        # (4H, E)  PyTorch layout
    w_hh = params["w_hh"]                        # (4H, H)
    b_ih = params["b_ih"]                        # (4H,)
    b_hh = params["b_hh"]                        # (4H,)
    w_cls = params["w_cls"]                      # (L, H)
    b_cls = params["b_cls"]                      # (L,)

    B, S = batch_input_ids.shape
    E = emb_table.shape[1]
    H = w_hh.shape[1]
    L = w_cls.shape[0]

    # Pad to vreg-friendly shapes: sublanes (8) for batch, lanes (128) for
    # feature dims.  Padded hidden lanes stay exactly zero through the LSTM
    # (zero weights/bias => i=f=o=0.5, g=0 => h_pad, c_pad remain 0).
    Bp = _round_up(B, 8)
    Ep = _round_up(E, 128)
    Hp = _round_up(H, 128)
    Lp = _round_up(L, 128)

    if chunk is None:
        chunk = S if S <= 32 else 32
    Sp = _round_up(S, chunk)
    mask_tail = Sp != S

    # Embedding gather directly in time-major order (avoids a full-tensor
    # (B,S,E) -> (S,B,E) transpose round-trip through HBM).
    x = jnp.take(emb_table, batch_input_ids.T, axis=0).astype(jnp.float32)  # (S,B,E)
    x = jnp.pad(x, ((0, Sp - S), (0, Bp - B), (0, Ep - E)))

    wih_t = _pad_gates(jnp.transpose(w_ih).astype(jnp.float32), Ep, H, Hp)  # (Ep,4Hp)
    whh_t = _pad_gates(jnp.transpose(w_hh).astype(jnp.float32), Hp, H, Hp)  # (Hp,4Hp)
    b = _pad_gates((b_ih + b_hh).reshape(1, -1).astype(jnp.float32), 1, H, Hp)
    wcls_t = jnp.pad(jnp.transpose(w_cls).astype(jnp.float32),
                     ((0, Hp - H), (0, Lp - L)))                             # (Hp,Lp)
    bcls = jnp.pad(b_cls.reshape(1, -1).astype(jnp.float32),
                   ((0, 0), (0, Lp - L)))                                    # (1,Lp)

    kernel = functools.partial(_lstm_cls_kernel, seq_len=S, chunk=chunk,
                               hidden_pad=Hp, mask_tail=mask_tail)

    out = pl.pallas_call(
        kernel,
        out_shape=jax.ShapeDtypeStruct((Bp, Lp), jnp.float32),
        grid_spec=pltpu.PrefetchScalarGridSpec(
            num_scalar_prefetch=0,
            grid=(Sp // chunk,),
            in_specs=[
                pl.BlockSpec((chunk, Bp, Ep), lambda i: (i, 0, 0)),  # x chunks
                pl.BlockSpec((Ep, 4 * Hp), lambda i: (0, 0)),        # W_ih (resident)
                pl.BlockSpec((Hp, 4 * Hp), lambda i: (0, 0)),        # W_hh (resident)
                pl.BlockSpec((1, 4 * Hp), lambda i: (0, 0)),         # bias
                pl.BlockSpec((Hp, Lp), lambda i: (0, 0)),            # W_cls
                pl.BlockSpec((1, Lp), lambda i: (0, 0)),             # b_cls
            ],
            out_specs=pl.BlockSpec((Bp, Lp), lambda i: (0, 0)),
            scratch_shapes=[
                pltpu.VMEM((Bp, Hp), jnp.float32),             # h
                pltpu.VMEM((Bp, Hp), jnp.float32),             # c
                pltpu.VMEM((chunk, Bp, 4 * Hp), jnp.float32),  # hoisted x-projection
            ],
        ),
        compiler_params=pltpu.CompilerParams(
            dimension_semantics=("arbitrary",),   # sequence axis is a recurrence
            vmem_limit_bytes=32 * 1024 * 1024,    # safe on v5e/v6e/v7x
        ),
    )(x, wih_t, whh_t, b, wcls_t, bcls)

    return out[:B, :L]


def _lstm_cls_reference(batch_input_ids, params):
    """Pure-JAX reference with PyTorch nn.LSTM + nn.Linear semantics."""
    x = jnp.take(params["emb"], batch_input_ids, axis=0).astype(jnp.float32)  # (B,S,E)
    w_ih = params["w_ih"].astype(jnp.float32)
    w_hh = params["w_hh"].astype(jnp.float32)
    b = (params["b_ih"] + params["b_hh"]).astype(jnp.float32)
    H = w_hh.shape[1]
    B = x.shape[0]

    def step(carry, x_t):
        h, c = carry
        z = x_t @ w_ih.T + h @ w_hh.T + b
        i = jax.nn.sigmoid(z[:, 0 * H:1 * H])
        f = jax.nn.sigmoid(z[:, 1 * H:2 * H])
        g = jnp.tanh(z[:, 2 * H:3 * H])
        o = jax.nn.sigmoid(z[:, 3 * H:4 * H])
        c = f * c + i * g
        h = o * jnp.tanh(c)
        return (h, c), None

    h0 = jnp.zeros((B, H), jnp.float32)
    (h, _), _ = lax.scan(step, (h0, h0), jnp.swapaxes(x, 0, 1))
    return (h @ params["w_cls"].T.astype(jnp.float32)
            + params["b_cls"].astype(jnp.float32))


def init_params(key, vocab_size, input_emb_dim, hidden_size, label_nums):
    ks = jax.random.split(key, 7)
    k_hs = 1.0 / jnp.sqrt(hidden_size)
    return {
        "emb":   jax.random.normal(ks[0], (vocab_size, input_emb_dim), jnp.float32),
        "w_ih":  jax.random.uniform(ks[1], (4 * hidden_size, input_emb_dim),
                                    jnp.float32, -k_hs, k_hs),
        "w_hh":  jax.random.uniform(ks[2], (4 * hidden_size, hidden_size),
                                    jnp.float32, -k_hs, k_hs),
        "b_ih":  jax.random.uniform(ks[3], (4 * hidden_size,), jnp.float32, -k_hs, k_hs),
        "b_hh":  jax.random.uniform(ks[4], (4 * hidden_size,), jnp.float32, -k_hs, k_hs),
        "w_cls": jax.random.uniform(ks[5], (label_nums, hidden_size),
                                    jnp.float32, -k_hs, k_hs),
        "b_cls": jax.random.uniform(ks[6], (label_nums,), jnp.float32, -k_hs, k_hs),
    }


if __name__ == "__main__":
    # Small shapes consistent with the module's forward.
    vocab_size, input_emb_dim, hidden_size, label_nums = 100, 16, 32, 4
    batch, seq_len = 2, 8

    key = jax.random.PRNGKey(0)
    k_param, k_ids = jax.random.split(key)
    params = init_params(k_param, vocab_size, input_emb_dim, hidden_size, label_nums)
    batch_input_ids = jax.random.randint(k_ids, (batch, seq_len), 0, vocab_size,
                                         dtype=jnp.int32)

    logits = jax.block_until_ready(jax.jit(lstm_classifier)(batch_input_ids, params))
    assert logits.shape == (batch, label_nums), logits.shape
    assert logits.dtype == jnp.float32

    ref = jax.block_until_ready(_lstm_cls_reference(batch_input_ids, params))
    max_err = float(jnp.max(jnp.abs(logits - ref)))
    assert max_err < 5e-3, f"max abs err {max_err}"
    print("KERNEL_OK")
</pallas_src>

<mosaic_0001>
module attributes {stable_mosaic.version = 11 : i64} {
  func.func @_lstm_cls_kernel(%arg0: i32, %arg1: memref<8x8x128xf32, #tpu.memory_space<vmem>>, %arg2: memref<128x512xf32, #tpu.memory_space<vmem>>, %arg3: memref<128x512xf32, #tpu.memory_space<vmem>>, %arg4: memref<1x512xf32, #tpu.memory_space<vmem>>, %arg5: memref<128x128xf32, #tpu.memory_space<vmem>>, %arg6: memref<1x128xf32, #tpu.memory_space<vmem>>, %arg7: memref<8x128xf32, #tpu.memory_space<vmem>>, %arg8: memref<8x128xf32, #tpu.memory_space<vmem>>, %arg9: memref<8x128xf32, #tpu.memory_space<vmem>>, %arg10: memref<8x8x512xf32, #tpu.memory_space<vmem>>) attributes {dimension_semantics = [#tpu.dimension_semantics<arbitrary>], iteration_bounds = array<i64: 1>, scalar_prefetch = 0 : i64, scratch_operands = 3 : i64, tpu.core_type = #tpu.core_type<tc>, window_params = [{transform_indices = @transform_0, window_bounds = array<i64: 8, 8, 128>}, {pipeline_mode = #tpu.pipeline_mode<synchronous>, transform_indices = @transform_1, window_bounds = array<i64: 128, 512>}, {pipeline_mode = #tpu.pipeline_mode<synchronous>, transform_indices = @transform_2, window_bounds = array<i64: 128, 512>}, {pipeline_mode = #tpu.pipeline_mode<synchronous>, transform_indices = @transform_3, window_bounds = array<i64: 1, 512>}, {pipeline_mode = #tpu.pipeline_mode<synchronous>, transform_indices = @transform_4, window_bounds = array<i64: 128, 128>}, {pipeline_mode = #tpu.pipeline_mode<synchronous>, transform_indices = @transform_5, window_bounds = array<i64: 1, 128>}, {pipeline_mode = #tpu.pipeline_mode<synchronous>, transform_indices = @transform_6, window_bounds = array<i64: 8, 128>}]} {
    %c0_i32 = arith.constant 0 : i32
    %0 = arith.cmpi eq, %arg0, %c0_i32 : i32
    %1 = arith.extui %0 : i1 to i32
    %c0_i32_0 = arith.constant 0 : i32
    %2 = arith.cmpi ne, %1, %c0_i32_0 : i32
    scf.if %2 {
      %cst_85 = arith.constant 0.000000e+00 : f32
      %275 = vector.broadcast %cst_85 : f32 to vector<8x128xf32>
      %c0_86 = arith.constant 0 : index
      %c0_87 = arith.constant 0 : index
      %276 = vector.load %arg8[%c0_86, %c0_87] : memref<8x128xf32, #tpu.memory_space<vmem>>, vector<8x128xf32>
      tpu.vector_store %arg8[%c0_86, %c0_87], %275 {strides = array<i32>} : memref<8x128xf32, #tpu.memory_space<vmem>>, vector<8x128xf32>,
      %cst_88 = arith.constant 0.000000e+00 : f32
      %277 = vector.broadcast %cst_88 : f32 to vector<8x128xf32>
      %c0_89 = arith.constant 0 : index
      %c0_90 = arith.constant 0 : index
      %278 = vector.load %arg9[%c0_89, %c0_90] : memref<8x128xf32, #tpu.memory_space<vmem>>, vector<8x128xf32>
      tpu.vector_store %arg9[%c0_89, %c0_90], %277 {strides = array<i32>} : memref<8x128xf32, #tpu.memory_space<vmem>>, vector<8x128xf32>,
    } else {
    }
    %c0 = arith.constant 0 : index
    %c0_1 = arith.constant 0 : index
    %c0_2 = arith.constant 0 : index
    %3 = vector.load %arg1[%c0, %c0_1, %c0_2] : memref<8x8x128xf32, #tpu.memory_space<vmem>>, vector<8x8x128xf32>
    %4 = vector.shape_cast %3 : vector<8x8x128xf32> to vector<64x128xf32>
    %c0_3 = arith.constant 0 : index
    %c0_4 = arith.constant 0 : index
    %5 = vector.load %arg2[%c0_3, %c0_4] : memref<128x512xf32, #tpu.memory_space<vmem>>, vector<128x512xf32>
    %cst = arith.constant dense<0.000000e+00> : vector<64x512xf32>
    %6 = tpu.matmul %4, %5, %cst {dimension_numbers = #tpu.dot_dimension_numbers<[1], [0], [0], [1], [0, 0, 1, 1], [], []>} : vector<64x128xf32>, vector<128x512xf32>, vector<64x512xf32> -> vector<64x512xf32>
    %7 = vector.shape_cast %6 : vector<64x512xf32> to vector<8x8x512xf32>
    %c0_5 = arith.constant 0 : index
    %c0_6 = arith.constant 0 : index
    %c0_7 = arith.constant 0 : index
    %8 = vector.load %arg10[%c0_5, %c0_6, %c0_7] : memref<8x8x512xf32, #tpu.memory_space<vmem>>, vector<8x8x512xf32>
    tpu.vector_store %arg10[%c0_5, %c0_6, %c0_7], %7 {strides = array<i32>} : memref<8x8x512xf32, #tpu.memory_space<vmem>>, vector<8x8x512xf32>,
    %c0_8 = arith.constant 0 : index
    %c0_9 = arith.constant 0 : index
    %9 = vector.load %arg4[%c0_8, %c0_9] : memref<1x512xf32, #tpu.memory_space<vmem>>, vector<1x512xf32>
    %10 = vector.shape_cast %9 : vector<1x512xf32> to vector<1x512xf32>
    %11 = vector.broadcast %10 : vector<1x512xf32> to vector<8x512xf32>
    %c0_10 = arith.constant 0 : index
    %c0_11 = arith.constant 0 : index
    %12 = vector.load %arg8[%c0_10, %c0_11] : memref<8x128xf32, #tpu.memory_space<vmem>>, vector<8x128xf32>
    %c0_12 = arith.constant 0 : index
    %c0_13 = arith.constant 0 : index
    %13 = vector.load %arg9[%c0_12, %c0_13] : memref<8x128xf32, #tpu.memory_space<vmem>>, vector<8x128xf32>
    %c0_i32_14 = arith.constant 0 : i32
    %14 = arith.index_cast %c0_i32_14 : i32 to index
    %c0_15 = arith.constant 0 : index
    %c0_16 = arith.constant 0 : index
    %15 = vector.load %arg10[%14, %c0_15, %c0_16] : memref<8x8x512xf32, #tpu.memory_space<vmem>>, vector<1x8x512xf32>
    %16 = vector.shape_cast %15 : vector<1x8x512xf32> to vector<8x512xf32>
    %c0_17 = arith.constant 0 : index
    %c0_18 = arith.constant 0 : index
    %17 = vector.load %arg3[%c0_17, %c0_18] : memref<128x512xf32, #tpu.memory_space<vmem>>, vector<128x512xf32>
    %cst_19 = arith.constant dense<0.000000e+00> : vector<8x512xf32>
    %18 = tpu.matmul %12, %17, %cst_19 {dimension_numbers = #tpu.dot_dimension_numbers<[1], [0], [0], [1], [0, 0, 1, 1], [], []>} : vector<8x128xf32>, vector<128x512xf32>, vector<8x512xf32> -> vector<8x512xf32>
    %19 = arith.addf %16, %18 : vector<8x512xf32>
    %20 = arith.addf %19, %11 : vector<8x512xf32>
    %21 = vector.extract_strided_slice %20 {offsets = [0, 0], sizes = [8, 128], strides = [1, 1]} : vector<8x512xf32> to vector<8x128xf32>
    %22 = arith.negf %21 : vector<8x128xf32>
    %23 = math.exp %22 : vector<8x128xf32>
    %cst_20 = arith.constant 1.000000e+00 : f32
    %24 = vector.broadcast %cst_20 : f32 to vector<8x128xf32>
    %25 = arith.addf %24, %23 : vector<8x128xf32>
    %26 = arith.divf %24, %25 : vector<8x128xf32>
    %27 = vector.extract_strided_slice %20 {offsets = [0, 128], sizes = [8, 128], strides = [1, 1]} : vector<8x512xf32> to vector<8x128xf32>
    %28 = arith.negf %27 : vector<8x128xf32>
    %29 = math.exp %28 : vector<8x128xf32>
    %cst_21 = arith.constant 1.000000e+00 : f32
    %30 = vector.broadcast %cst_21 : f32 to vector<8x128xf32>
    %31 = arith.addf %30, %29 : vector<8x128xf32>
    %32 = arith.divf %30, %31 : vector<8x128xf32>
    %33 = vector.extract_strided_slice %20 {offsets = [0, 256], sizes = [8, 128], strides = [1, 1]} : vector<8x512xf32> to vector<8x128xf32>
    %34 = math.tanh %33 : vector<8x128xf32>
    %35 = vector.extract_strided_slice %20 {offsets = [0, 384], sizes = [8, 128], strides = [1, 1]} : vector<8x512xf32> to vector<8x128xf32>
    %36 = arith.negf %35 : vector<8x128xf32>
    %37 = math.exp %36 : vector<8x128xf32>
    %cst_22 = arith.constant 1.000000e+00 : f32
    %38 = vector.broadcast %cst_22 : f32 to vector<8x128xf32>
    %39 = arith.addf %38, %37 : vector<8x128xf32>
    %40 = arith.divf %38, %39 : vector<8x128xf32>
    %41 = arith.mulf %32, %13 : vector<8x128xf32>
    %42 = arith.mulf %26, %34 : vector<8x128xf32>
    %43 = arith.addf %41, %42 : vector<8x128xf32>
    %44 = math.tanh %43 : vector<8x128xf32>
    %45 = arith.mulf %40, %44 : vector<8x128xf32>
    %c1_i32 = arith.constant 1 : i32
    %46 = arith.index_cast %c1_i32 : i32 to index
    %c0_23 = arith.constant 0 : index
    %c0_24 = arith.constant 0 : index
    %47 = vector.load %arg10[%46, %c0_23, %c0_24] : memref<8x8x512xf32, #tpu.memory_space<vmem>>, vector<1x8x512xf32>
    %48 = vector.shape_cast %47 : vector<1x8x512xf32> to vector<8x512xf32>
    %c0_25 = arith.constant 0 : index
    %c0_26 = arith.constant 0 : index
    %49 = vector.load %arg3[%c0_25, %c0_26] : memref<128x512xf32, #tpu.memory_space<vmem>>, vector<128x512xf32>
    %cst_27 = arith.constant dense<0.000000e+00> : vector<8x512xf32>
    %50 = tpu.matmul %45, %49, %cst_27 {dimension_numbers = #tpu.dot_dimension_numbers<[1], [0], [0], [1], [0, 0, 1, 1], [], []>} : vector<8x128xf32>, vector<128x512xf32>, vector<8x512xf32> -> vector<8x512xf32>
    %51 = arith.addf %48, %50 : vector<8x512xf32>
    %52 = arith.addf %51, %11 : vector<8x512xf32>
    %53 = vector.extract_strided_slice %52 {offsets = [0, 0], sizes = [8, 128], strides = [1, 1]} : vector<8x512xf32> to vector<8x128xf32>
    %54 = arith.negf %53 : vector<8x128xf32>
    %55 = math.exp %54 : vector<8x128xf32>
    %cst_28 = arith.constant 1.000000e+00 : f32
    %56 = vector.broadcast %cst_28 : f32 to vector<8x128xf32>
    %57 = arith.addf %56, %55 : vector<8x128xf32>
    %58 = arith.divf %56, %57 : vector<8x128xf32>
    %59 = vector.extract_strided_slice %52 {offsets = [0, 128], sizes = [8, 128], strides = [1, 1]} : vector<8x512xf32> to vector<8x128xf32>
    %60 = arith.negf %59 : vector<8x128xf32>
    %61 = math.exp %60 : vector<8x128xf32>
    %cst_29 = arith.constant 1.000000e+00 : f32
    %62 = vector.broadcast %cst_29 : f32 to vector<8x128xf32>
    %63 = arith.addf %62, %61 : vector<8x128xf32>
    %64 = arith.divf %62, %63 : vector<8x128xf32>
    %65 = vector.extract_strided_slice %52 {offsets = [0, 256], sizes = [8, 128], strides = [1, 1]} : vector<8x512xf32> to vector<8x128xf32>
    %66 = math.tanh %65 : vector<8x128xf32>
    %67 = vector.extract_strided_slice %52 {offsets = [0, 384], sizes = [8, 128], strides = [1, 1]} : vector<8x512xf32> to vector<8x128xf32>
    %68 = arith.negf %67 : vector<8x128xf32>
    %69 = math.exp %68 : vector<8x128xf32>
    %cst_30 = arith.constant 1.000000e+00 : f32
    %70 = vector.broadcast %cst_30 : f32 to vector<8x128xf32>
    %71 = arith.addf %70, %69 : vector<8x128xf32>
    %72 = arith.divf %70, %71 : vector<8x128xf32>
    %73 = arith.mulf %64, %43 : vector<8x128xf32>
    %74 = arith.mulf %58, %66 : vector<8x128xf32>
    %75 = arith.addf %73, %74 : vector<8x128xf32>
    %76 = math.tanh %75 : vector<8x128xf32>
    %77 = arith.mulf %72, %76 : vector<8x128xf32>
    %c2_i32 = arith.constant 2 : i32
    %78 = arith.index_cast %c2_i32 : i32 to index
    %c0_31 = arith.constant 0 : index
    %c0_32 = arith.constant 0 : index
    %79 = vector.load %arg10[%78, %c0_31, %c0_32] : memref<8x8x512xf32, #tpu.memory_space<vmem>>, vector<1x8x512xf32>
    %80 = vector.shape_cast %79 : vector<1x8x512xf32> to vector<8x512xf32>
    %c0_33 = arith.constant 0 : index
    %c0_34 = arith.constant 0 : index
    %81 = vector.load %arg3[%c0_33, %c0_34] : memref<128x512xf32, #tpu.memory_space<vmem>>, vector<128x512xf32>
    %cst_35 = arith.constant dense<0.000000e+00> : vector<8x512xf32>
    %82 = tpu.matmul %77, %81, %cst_35 {dimension_numbers = #tpu.dot_dimension_numbers<[1], [0], [0], [1], [0, 0, 1, 1], [], []>} : vector<8x128xf32>, vector<128x512xf32>, vector<8x512xf32> -> vector<8x512xf32>
    %83 = arith.addf %80, %82 : vector<8x512xf32>
    %84 = arith.addf %83, %11 : vector<8x512xf32>
    %85 = vector.extract_strided_slice %84 {offsets = [0, 0], sizes = [8, 128], strides = [1, 1]} : vector<8x512xf32> to vector<8x128xf32>
    %86 = arith.negf %85 : vector<8x128xf32>
    %87 = math.exp %86 : vector<8x128xf32>
    %cst_36 = arith.constant 1.000000e+00 : f32
    %88 = vector.broadcast %cst_36 : f32 to vector<8x128xf32>
    %89 = arith.addf %88, %87 : vector<8x128xf32>
    %90 = arith.divf %88, %89 : vector<8x128xf32>
    %91 = vector.extract_strided_slice %84 {offsets = [0, 128], sizes = [8, 128], strides = [1, 1]} : vector<8x512xf32> to vector<8x128xf32>
    %92 = arith.negf %91 : vector<8x128xf32>
    %93 = math.exp %92 : vector<8x128xf32>
    %cst_37 = arith.constant 1.000000e+00 : f32
    %94 = vector.broadcast %cst_37 : f32 to vector<8x128xf32>
    %95 = arith.addf %94, %93 : vector<8x128xf32>
    %96 = arith.divf %94, %95 : vector<8x128xf32>
    %97 = vector.extract_strided_slice %84 {offsets = [0, 256], sizes = [8, 128], strides = [1, 1]} : vector<8x512xf32> to vector<8x128xf32>
    %98 = math.tanh %97 : vector<8x128xf32>
    %99 = vector.extract_strided_slice %84 {offsets = [0, 384], sizes = [8, 128], strides = [1, 1]} : vector<8x512xf32> to vector<8x128xf32>
    %100 = arith.negf %99 : vector<8x128xf32>
    %101 = math.exp %100 : vector<8x128xf32>
    %cst_38 = arith.constant 1.000000e+00 : f32
    %102 = vector.broadcast %cst_38 : f32 to vector<8x128xf32>
    %103 = arith.addf %102, %101 : vector<8x128xf32>
    %104 = arith.divf %102, %103 : vector<8x128xf32>
    %105 = arith.mulf %96, %75 : vector<8x128xf32>
    %106 = arith.mulf %90, %98 : vector<8x128xf32>
    %107 = arith.addf %105, %106 : vector<8x128xf32>
    %108 = math.tanh %107 : vector<8x128xf32>
    %109 = arith.mulf %104, %108 : vector<8x128xf32>
    %c3_i32 = arith.constant 3 : i32
    %110 = arith.index_cast %c3_i32 : i32 to index
    %c0_39 = arith.constant 0 : index
    %c0_40 = arith.constant 0 : index
    %111 = vector.load %arg10[%110, %c0_39, %c0_40] : memref<8x8x512xf32, #tpu.memory_space<vmem>>, vector<1x8x512xf32>
    %112 = vector.shape_cast %111 : vector<1x8x512xf32> to vector<8x512xf32>
    %c0_41 = arith.constant 0 : index
    %c0_42 = arith.constant 0 : index
    %113 = vector.load %arg3[%c0_41, %c0_42] : memref<128x512xf32, #tpu.memory_space<vmem>>, vector<128x512xf32>
    %cst_43 = arith.constant dense<0.000000e+00> : vector<8x512xf32>
    %114 = tpu.matmul %109, %113, %cst_43 {dimension_numbers = #tpu.dot_dimension_numbers<[1], [0], [0], [1], [0, 0, 1, 1], [], []>} : vector<8x128xf32>, vector<128x512xf32>, vector<8x512xf32> -> vector<8x512xf32>
    %115 = arith.addf %112, %114 : vector<8x512xf32>
    %116 = arith.addf %115, %11 : vector<8x512xf32>
    %117 = vector.extract_strided_slice %116 {offsets = [0, 0], sizes = [8, 128], strides = [1, 1]} : vector<8x512xf32> to vector<8x128xf32>
    %118 = arith.negf %117 : vector<8x128xf32>
    %119 = math.exp %118 : vector<8x128xf32>
    %cst_44 = arith.constant 1.000000e+00 : f32
    %120 = vector.broadcast %cst_44 : f32 to vector<8x128xf32>
    %121 = arith.addf %120, %119 : vector<8x128xf32>
    %122 = arith.divf %120, %121 : vector<8x128xf32>
    %123 = vector.extract_strided_slice %116 {offsets = [0, 128], sizes = [8, 128], strides = [1, 1]} : vector<8x512xf32> to vector<8x128xf32>
    %124 = arith.negf %123 : vector<8x128xf32>
    %125 = math.exp %124 : vector<8x128xf32>
    %cst_45 = arith.constant 1.000000e+00 : f32
    %126 = vector.broadcast %cst_45 : f32 to vector<8x128xf32>
    %127 = arith.addf %126, %125 : vector<8x128xf32>
    %128 = arith.divf %126, %127 : vector<8x128xf32>
    %129 = vector.extract_strided_slice %116 {offsets = [0, 256], sizes = [8, 128], strides = [1, 1]} : vector<8x512xf32> to vector<8x128xf32>
    %130 = math.tanh %129 : vector<8x128xf32>
    %131 = vector.extract_strided_slice %116 {offsets = [0, 384], sizes = [8, 128], strides = [1, 1]} : vector<8x512xf32> to vector<8x128xf32>
    %132 = arith.negf %131 : vector<8x128xf32>
    %133 = math.exp %132 : vector<8x128xf32>
    %cst_46 = arith.constant 1.000000e+00 : f32
    %134 = vector.broadcast %cst_46 : f32 to vector<8x128xf32>
    %135 = arith.addf %134, %133 : vector<8x128xf32>
    %136 = arith.divf %134, %135 : vector<8x128xf32>
    %137 = arith.mulf %128, %107 : vector<8x128xf32>
    %138 = arith.mulf %122, %130 : vector<8x128xf32>
    %139 = arith.addf %137, %138 : vector<8x128xf32>
    %140 = math.tanh %139 : vector<8x128xf32>
    %141 = arith.mulf %136, %140 : vector<8x128xf32>
    %c4_i32 = arith.constant 4 : i32
    %142 = arith.index_cast %c4_i32 : i32 to index
    %c0_47 = arith.constant 0 : index
    %c0_48 = arith.constant 0 : index
    %143 = vector.load %arg10[%142, %c0_47, %c0_48] : memref<8x8x512xf32, #tpu.memory_space<vmem>>, vector<1x8x512xf32>
    %144 = vector.shape_cast %143 : vector<1x8x512xf32> to vector<8x512xf32>
    %c0_49 = arith.constant 0 : index
    %c0_50 = arith.constant 0 : index
    %145 = vector.load %arg3[%c0_49, %c0_50] : memref<128x512xf32, #tpu.memory_space<vmem>>, vector<128x512xf32>
    %cst_51 = arith.constant dense<0.000000e+00> : vector<8x512xf32>
    %146 = tpu.matmul %141, %145, %cst_51 {dimension_numbers = #tpu.dot_dimension_numbers<[1], [0], [0], [1], [0, 0, 1, 1], [], []>} : vector<8x128xf32>, vector<128x512xf32>, vector<8x512xf32> -> vector<8x512xf32>
    %147 = arith.addf %144, %146 : vector<8x512xf32>
    %148 = arith.addf %147, %11 : vector<8x512xf32>
    %149 = vector.extract_strided_slice %148 {offsets = [0, 0], sizes = [8, 128], strides = [1, 1]} : vector<8x512xf32> to vector<8x128xf32>
    %150 = arith.negf %149 : vector<8x128xf32>
    %151 = math.exp %150 : vector<8x128xf32>
    %cst_52 = arith.constant 1.000000e+00 : f32
    %152 = vector.broadcast %cst_52 : f32 to vector<8x128xf32>
    %153 = arith.addf %152, %151 : vector<8x128xf32>
    %154 = arith.divf %152, %153 : vector<8x128xf32>
    %155 = vector.extract_strided_slice %148 {offsets = [0, 128], sizes = [8, 128], strides = [1, 1]} : vector<8x512xf32> to vector<8x128xf32>
    %156 = arith.negf %155 : vector<8x128xf32>
    %157 = math.exp %156 : vector<8x128xf32>
    %cst_53 = arith.constant 1.000000e+00 : f32
    %158 = vector.broadcast %cst_53 : f32 to vector<8x128xf32>
    %159 = arith.addf %158, %157 : vector<8x128xf32>
    %160 = arith.divf %158, %159 : vector<8x128xf32>
    %161 = vector.extract_strided_slice %148 {offsets = [0, 256], sizes = [8, 128], strides = [1, 1]} : vector<8x512xf32> to vector<8x128xf32>
    %162 = math.tanh %161 : vector<8x128xf32>
    %163 = vector.extract_strided_slice %148 {offsets = [0, 384], sizes = [8, 128], strides = [1, 1]} : vector<8x512xf32> to vector<8x128xf32>
    %164 = arith.negf %163 : vector<8x128xf32>
    %165 = math.exp %164 : vector<8x128xf32>
    %cst_54 = arith.constant 1.000000e+00 : f32
    %166 = vector.broadcast %cst_54 : f32 to vector<8x128xf32>
    %167 = arith.addf %166, %165 : vector<8x128xf32>
    %168 = arith.divf %166, %167 : vector<8x128xf32>
    %169 = arith.mulf %160, %139 : vector<8x128xf32>
    %170 = arith.mulf %154, %162 : vector<8x128xf32>
    %171 = arith.addf %169, %170 : vector<8x128xf32>
    %172 = math.tanh %171 : vector<8x128xf32>
    %173 = arith.mulf %168, %172 : vector<8x128xf32>
    %c5_i32 = arith.constant 5 : i32
    %174 = arith.index_cast %c5_i32 : i32 to index
    %c0_55 = arith.constant 0 : index
    %c0_56 = arith.constant 0 : index
    %175 = vector.load %arg10[%174, %c0_55, %c0_56] : memref<8x8x512xf32, #tpu.memory_space<vmem>>, vector<1x8x512xf32>
    %176 = vector.shape_cast %175 : vector<1x8x512xf32> to vector<8x512xf32>
    %c0_57 = arith.constant 0 : index
    %c0_58 = arith.constant 0 : index
    %177 = vector.load %arg3[%c0_57, %c0_58] : memref<128x512xf32, #tpu.memory_space<vmem>>, vector<128x512xf32>
    %cst_59 = arith.constant dense<0.000000e+00> : vector<8x512xf32>
    %178 = tpu.matmul %173, %177, %cst_59 {dimension_numbers = #tpu.dot_dimension_numbers<[1], [0], [0], [1], [0, 0, 1, 1], [], []>} : vector<8x128xf32>, vector<128x512xf32>, vector<8x512xf32> -> vector<8x512xf32>
    %179 = arith.addf %176, %178 : vector<8x512xf32>
    %180 = arith.addf %179, %11 : vector<8x512xf32>
    %181 = vector.extract_strided_slice %180 {offsets = [0, 0], sizes = [8, 128], strides = [1, 1]} : vector<8x512xf32> to vector<8x128xf32>
    %182 = arith.negf %181 : vector<8x128xf32>
    %183 = math.exp %182 : vector<8x128xf32>
    %cst_60 = arith.constant 1.000000e+00 : f32
    %184 = vector.broadcast %cst_60 : f32 to vector<8x128xf32>
    %185 = arith.addf %184, %183 : vector<8x128xf32>
    %186 = arith.divf %184, %185 : vector<8x128xf32>
    %187 = vector.extract_strided_slice %180 {offsets = [0, 128], sizes = [8, 128], strides = [1, 1]} : vector<8x512xf32> to vector<8x128xf32>
    %188 = arith.negf %187 : vector<8x128xf32>
    %189 = math.exp %188 : vector<8x128xf32>
    %cst_61 = arith.constant 1.000000e+00 : f32
    %190 = vector.broadcast %cst_61 : f32 to vector<8x128xf32>
    %191 = arith.addf %190, %189 : vector<8x128xf32>
    %192 = arith.divf %190, %191 : vector<8x128xf32>
    %193 = vector.extract_strided_slice %180 {offsets = [0, 256], sizes = [8, 128], strides = [1, 1]} : vector<8x512xf32> to vector<8x128xf32>
    %194 = math.tanh %193 : vector<8x128xf32>
    %195 = vector.extract_strided_slice %180 {offsets = [0, 384], sizes = [8, 128], strides = [1, 1]} : vector<8x512xf32> to vector<8x128xf32>
    %196 = arith.negf %195 : vector<8x128xf32>
    %197 = math.exp %196 : vector<8x128xf32>
    %cst_62 = arith.constant 1.000000e+00 : f32
    %198 = vector.broadcast %cst_62 : f32 to vector<8x128xf32>
    %199 = arith.addf %198, %197 : vector<8x128xf32>
    %200 = arith.divf %198, %199 : vector<8x128xf32>
    %201 = arith.mulf %192, %171 : vector<8x128xf32>
    %202 = arith.mulf %186, %194 : vector<8x128xf32>
    %203 = arith.addf %201, %202 : vector<8x128xf32>
    %204 = math.tanh %203 : vector<8x128xf32>
    %205 = arith.mulf %200, %204 : vector<8x128xf32>
    %c6_i32 = arith.constant 6 : i32
    %206 = arith.index_cast %c6_i32 : i32 to index
    %c0_63 = arith.constant 0 : index
    %c0_64 = arith.constant 0 : index
    %207 = vector.load %arg10[%206, %c0_63, %c0_64] : memref<8x8x512xf32, #tpu.memory_space<vmem>>, vector<1x8x512xf32>
    %208 = vector.shape_cast %207 : vector<1x8x512xf32> to vector<8x512xf32>
    %c0_65 = arith.constant 0 : index
    %c0_66 = arith.constant 0 : index
    %209 = vector.load %arg3[%c0_65, %c0_66] : memref<128x512xf32, #tpu.memory_space<vmem>>, vector<128x512xf32>
    %cst_67 = arith.constant dense<0.000000e+00> : vector<8x512xf32>
    %210 = tpu.matmul %205, %209, %cst_67 {dimension_numbers = #tpu.dot_dimension_numbers<[1], [0], [0], [1], [0, 0, 1, 1], [], []>} : vector<8x128xf32>, vector<128x512xf32>, vector<8x512xf32> -> vector<8x512xf32>
    %211 = arith.addf %208, %210 : vector<8x512xf32>
    %212 = arith.addf %211, %11 : vector<8x512xf32>
    %213 = vector.extract_strided_slice %212 {offsets = [0, 0], sizes = [8, 128], strides = [1, 1]} : vector<8x512xf32> to vector<8x128xf32>
    %214 = arith.negf %213 : vector<8x128xf32>
    %215 = math.exp %214 : vector<8x128xf32>
    %cst_68 = arith.constant 1.000000e+00 : f32
    %216 = vector.broadcast %cst_68 : f32 to vector<8x128xf32>
    %217 = arith.addf %216, %215 : vector<8x128xf32>
    %218 = arith.divf %216, %217 : vector<8x128xf32>
    %219 = vector.extract_strided_slice %212 {offsets = [0, 128], sizes = [8, 128], strides = [1, 1]} : vector<8x512xf32> to vector<8x128xf32>
    %220 = arith.negf %219 : vector<8x128xf32>
    %221 = math.exp %220 : vector<8x128xf32>
    %cst_69 = arith.constant 1.000000e+00 : f32
    %222 = vector.broadcast %cst_69 : f32 to vector<8x128xf32>
    %223 = arith.addf %222, %221 : vector<8x128xf32>
    %224 = arith.divf %222, %223 : vector<8x128xf32>
    %225 = vector.extract_strided_slice %212 {offsets = [0, 256], sizes = [8, 128], strides = [1, 1]} : vector<8x512xf32> to vector<8x128xf32>
    %226 = math.tanh %225 : vector<8x128xf32>
    %227 = vector.extract_strided_slice %212 {offsets = [0, 384], sizes = [8, 128], strides = [1, 1]} : vector<8x512xf32> to vector<8x128xf32>
    %228 = arith.negf %227 : vector<8x128xf32>
    %229 = math.exp %228 : vector<8x128xf32>
    %cst_70 = arith.constant 1.000000e+00 : f32
    %230 = vector.broadcast %cst_70 : f32 to vector<8x128xf32>
    %231 = arith.addf %230, %229 : vector<8x128xf32>
    %232 = arith.divf %230, %231 : vector<8x128xf32>
    %233 = arith.mulf %224, %203 : vector<8x128xf32>
    %234 = arith.mulf %218, %226 : vector<8x128xf32>
    %235 = arith.addf %233, %234 : vector<8x128xf32>
    %236 = math.tanh %235 : vector<8x128xf32>
    %237 = arith.mulf %232, %236 : vector<8x128xf32>
    %c7_i32 = arith.constant 7 : i32
    %238 = arith.index_cast %c7_i32 : i32 to index
    %c0_71 = arith.constant 0 : index
    %c0_72 = arith.constant 0 : index
    %239 = vector.load %arg10[%238, %c0_71, %c0_72] : memref<8x8x512xf32, #tpu.memory_space<vmem>>, vector<1x8x512xf32>
    %240 = vector.shape_cast %239 : vector<1x8x512xf32> to vector<8x512xf32>
    %c0_73 = arith.constant 0 : index
    %c0_74 = arith.constant 0 : index
    %241 = vector.load %arg3[%c0_73, %c0_74] : memref<128x512xf32, #tpu.memory_space<vmem>>, vector<128x512xf32>
    %cst_75 = arith.constant dense<0.000000e+00> : vector<8x512xf32>
    %242 = tpu.matmul %237, %241, %cst_75 {dimension_numbers = #tpu.dot_dimension_numbers<[1], [0], [0], [1], [0, 0, 1, 1], [], []>} : vector<8x128xf32>, vector<128x512xf32>, vector<8x512xf32> -> vector<8x512xf32>
    %243 = arith.addf %240, %242 : vector<8x512xf32>
    %244 = arith.addf %243, %11 : vector<8x512xf32>
    %245 = vector.extract_strided_slice %244 {offsets = [0, 0], sizes = [8, 128], strides = [1, 1]} : vector<8x512xf32> to vector<8x128xf32>
    %246 = arith.negf %245 : vector<8x128xf32>
    %247 = math.exp %246 : vector<8x128xf32>
    %cst_76 = arith.constant 1.000000e+00 : f32
    %248 = vector.broadcast %cst_76 : f32 to vector<8x128xf32>
    %249 = arith.addf %248, %247 : vector<8x128xf32>
    %250 = arith.divf %248, %249 : vector<8x128xf32>
    %251 = vector.extract_strided_slice %244 {offsets = [0, 128], sizes = [8, 128], strides = [1, 1]} : vector<8x512xf32> to vector<8x128xf32>
    %252 = arith.negf %251 : vector<8x128xf32>
    %253 = math.exp %252 : vector<8x128xf32>
    %cst_77 = arith.constant 1.000000e+00 : f32
    %254 = vector.broadcast %cst_77 : f32 to vector<8x128xf32>
    %255 = arith.addf %254, %253 : vector<8x128xf32>
    %256 = arith.divf %254, %255 : vector<8x128xf32>
    %257 = vector.extract_strided_slice %244 {offsets = [0, 256], sizes = [8, 128], strides = [1, 1]} : vector<8x512xf32> to vector<8x128xf32>
    %258 = math.tanh %257 : vector<8x128xf32>
    %259 = vector.extract_strided_slice %244 {offsets = [0, 384], sizes = [8, 128], strides = [1, 1]} : vector<8x512xf32> to vector<8x128xf32>
    %260 = arith.negf %259 : vector<8x128xf32>
    %261 = math.exp %260 : vector<8x128xf32>
    %cst_78 = arith.constant 1.000000e+00 : f32
    %262 = vector.broadcast %cst_78 : f32 to vector<8x128xf32>
    %263 = arith.addf %262, %261 : vector<8x128xf32>
    %264 = arith.divf %262, %263 : vector<8x128xf32>
    %265 = arith.mulf %256, %235 : vector<8x128xf32>
    %266 = arith.mulf %250, %258 : vector<8x128xf32>
    %267 = arith.addf %265, %266 : vector<8x128xf32>
    %268 = math.tanh %267 : vector<8x128xf32>
    %269 = arith.mulf %264, %268 : vector<8x128xf32>
    %c8_i32 = arith.constant 8 : i32
    %c0_79 = arith.constant 0 : index
    %c0_80 = arith.constant 0 : index
    %270 = vector.load %arg8[%c0_79, %c0_80] : memref<8x128xf32, #tpu.memory_space<vmem>>, vector<8x128xf32>
    tpu.vector_store %arg8[%c0_79, %c0_80], %269 {strides = array<i32>} : memref<8x128xf32, #tpu.memory_space<vmem>>, vector<8x128xf32>,
    %c0_81 = arith.constant 0 : index
    %c0_82 = arith.constant 0 : index
    %271 = vector.load %arg9[%c0_81, %c0_82] : memref<8x128xf32, #tpu.memory_space<vmem>>, vector<8x128xf32>
    tpu.vector_store %arg9[%c0_81, %c0_82], %267 {strides = array<i32>} : memref<8x128xf32, #tpu.memory_space<vmem>>, vector<8x128xf32>,
    %c0_i32_83 = arith.constant 0 : i32
    %272 = arith.cmpi eq, %arg0, %c0_i32_83 : i32
    %273 = arith.extui %272 : i1 to i32
    %c0_i32_84 = arith.constant 0 : i32
    %274 = arith.cmpi ne, %273, %c0_i32_84 : i32
    scf.if %274 {
      %c0_85 = arith.constant 0 : index
      %c0_86 = arith.constant 0 : index
      %275 = vector.load %arg5[%c0_85, %c0_86] : memref<128x128xf32, #tpu.memory_space<vmem>>, vector<128x128xf32>
      %cst_87 = arith.constant dense<0.000000e+00> : vector<8x128xf32>
      %276 = tpu.matmul %269, %275, %cst_87 {dimension_numbers = #tpu.dot_dimension_numbers<[1], [0], [0], [1], [0, 0, 1, 1], [], []>} : vector<8x128xf32>, vector<128x128xf32>, vector<8x128xf32> -> vector<8x128xf32>
      %c0_88 = arith.constant 0 : index
      %c0_89 = arith.constant 0 : index
      %277 = vector.load %arg6[%c0_88, %c0_89] : memref<1x128xf32, #tpu.memory_space<vmem>>, vector<1x128xf32>
      %278 = vector.broadcast %277 : vector<1x128xf32> to vector<8x128xf32>
      %279 = arith.addf %276, %278 : vector<8x128xf32>
      %c0_90 = arith.constant 0 : index
      %c0_91 = arith.constant 0 : index
      %280 = vector.load %arg7[%c0_90, %c0_91] : memref<8x128xf32, #tpu.memory_space<vmem>>, vector<8x128xf32>
      tpu.vector_store %arg7[%c0_90, %c0_91], %279 {strides = array<i32>} : memref<8x128xf32, #tpu.memory_space<vmem>>, vector<8x128xf32>,
    } else {
    }
    return
  }
  func.func @transform_0(%arg0: i32) -> (i32, i32, i32) {
    %c0_i32 = arith.constant 0 : i32
    %c0_i32_0 = arith.constant 0 : i32
    %c0_i32_1 = arith.constant 0 : i32
    return %arg0, %c0_i32, %c0_i32_0 : i32, i32, i32
  }
  func.func @transform_1(%arg0: i32) -> (i32, i32) {
    %c0_i32 = arith.constant 0 : i32
    %c0_i32_0 = arith.constant 0 : i32
    %c0_i32_1 = arith.constant 0 : i32
    return %c0_i32, %c0_i32_0 : i32, i32
  }
  func.func @transform_2(%arg0: i32) -> (i32, i32) {
    %c0_i32 = arith.constant 0 : i32
    %c0_i32_0 = arith.constant 0 : i32
    %c0_i32_1 = arith.constant 0 : i32
    return %c0_i32, %c0_i32_0 : i32, i32
  }
  func.func @transform_3(%arg0: i32) -> (i32, i32) {
    %c0_i32 = arith.constant 0 : i32
    %c0_i32_0 = arith.constant 0 : i32
    %c0_i32_1 = arith.constant 0 : i32
    return %c0_i32, %c0_i32_0 : i32, i32
  }
  func.func @transform_4(%arg0: i32) -> (i32, i32) {
    %c0_i32 = arith.constant 0 : i32
    %c0_i32_0 = arith.constant 0 : i32
    %c0_i32_1 = arith.constant 0 : i32
    return %c0_i32, %c0_i32_0 : i32, i32
  }
  func.func @transform_5(%arg0: i32) -> (i32, i32) {
    %c0_i32 = arith.constant 0 : i32
    %c0_i32_0 = arith.constant 0 : i32
    %c0_i32_1 = arith.constant 0 : i32
    return %c0_i32, %c0_i32_0 : i32, i32
  }
  func.func @transform_6(%arg0: i32) -> (i32, i32) {
    %c0_i32 = arith.constant 0 : i32
    %c0_i32_0 = arith.constant 0 : i32
    %c0_i32_1 = arith.constant 0 : i32
    return %c0_i32, %c0_i32_0 : i32, i32
  }
}

</mosaic_0001>

<llo_original>
// kernel: lstm_classifier.1
$region0: #{lstm_classifier.1}
  #allocation0 [shape = 'u32[]', space=smem, size = 0x4, offset = 0x4, fixed_abs, tag = 'smem constant byte address 0x4 - core index']
  #allocation1 [shape = 'u32[144,128]{1,0:T(1,128)}', space=vmem, size = 0x12000, scoped, tag = 'internal scratch']
  #allocation2 [shape = 'f32[8,128]{1,0:T(8,128)}', space=vmem, size = 0x1000, scoped, tag = 'scratch operand']
  #allocation3 [shape = 'f32[8,128]{1,0:T(8,128)}', space=vmem, size = 0x1000, scoped, tag = 'scratch operand']
  #allocation4 [shape = 'f32[8,8,512]{2,1,0:T(8,128)}', space=vmem, size = 0x20000, scoped, tag = 'scratch operand']
  %s0 = inlined_call_operand.vmem [shape: f32[8,8,128], index: 0, kind: input, shape index: {}]
  %s1 = inlined_call_operand.vmem [shape: f32[128,512], index: 1, kind: input, shape index: {}]
  %s2 = inlined_call_operand.vmem [shape: f32[128,512], index: 2, kind: input, shape index: {}]
  %s3 = inlined_call_operand.vmem [shape: f32[1,512], index: 3, kind: input, shape index: {}]
  %s4 = inlined_call_operand.vmem [shape: f32[128,128], index: 4, kind: input, shape index: {}]
  %s5 = inlined_call_operand.vmem [shape: f32[1,128], index: 5, kind: input, shape index: {}]
  %s6 = inlined_call_operand.vmem [shape: f32[8,128], index: 6, kind: output, shape index: {}]
  %s7 = sld [smem:[#allocation0]]
  $region42: #{lstm_classifier.1} parent=0
    _
  %s9 = ssub.s32 1, %s7
  %s10 = scalar_select 0, %s9, %s7
  // Predicated region
  $region2: #{lstm_classifier.1} parent=0 // pred_check
    _
  $region3: #{lstm_classifier.1} parent=0 // pred_check_branch
    %12 = sbr.rel (0) target = $region5
  $region4: #{lstm_classifier.1} parent=0 // pred_region
    _
  $region5: #{lstm_classifier.1} parent=0 // pred_fallthru
    _
  // Predicated region
  $region6: #{lstm_classifier.1} parent=0 // pred_check
    _
  $region7: #{lstm_classifier.1} parent=0 // pred_check_branch
    %14 = sbr.rel (0) target = $region9
  $region8: #{lstm_classifier.1} parent=0 // pred_region
    _
  $region9: #{lstm_classifier.1} parent=0 // pred_fallthru
    _
  // Predicated region
  $region10: #{lstm_classifier.1} parent=0 // pred_check
    _
  $region11: #{lstm_classifier.1} parent=0 // pred_check_branch
    %16 = sbr.rel (0) target = $region13
  $region12: #{lstm_classifier.1} parent=0 // pred_region
    _
  $region13: #{lstm_classifier.1} parent=0 // pred_fallthru
    _
  // Predicated region
  $region14: #{lstm_classifier.1} parent=0 // pred_check
    _
  $region15: #{lstm_classifier.1} parent=0 // pred_check_branch
    %18 = sbr.rel (0) target = $region17
  $region16: #{lstm_classifier.1} parent=0 // pred_region
    _
  $region17: #{lstm_classifier.1} parent=0 // pred_fallthru
    _
  // Predicated region
  $region18: #{lstm_classifier.1} parent=0 // pred_check
    _
  $region19: #{lstm_classifier.1} parent=0 // pred_check_branch
    %20 = sbr.rel (0) target = $region21
  $region20: #{lstm_classifier.1} parent=0 // pred_region
    _
  $region21: #{lstm_classifier.1} parent=0 // pred_fallthru
    _
  // Predicated region
  $region22: #{lstm_classifier.1} parent=0 // pred_check
    _
  $region23: #{lstm_classifier.1} parent=0 // pred_check_branch
    %22 = sbr.rel (0) target = $region25
  $region24: #{lstm_classifier.1} parent=0 // pred_region
    _
  $region25: #{lstm_classifier.1} parent=0 // pred_fallthru
    _
  %p23 = scmp.eq.s32.totalorder 0, 0
  // Predicated region
  $region26: #{lstm_classifier.1} parent=0 // pred_check
    %p24 = pneg %p23
  $region27: #{lstm_classifier.1} parent=0 // pred_check_branch
    %26 = sbr.rel (%p24) target = $region29
  $region28: #{lstm_classifier.1} parent=0 // pred_region
    %27 = vst [vmem:[#allocation2] sm:$0xff] 0.0
    %28 = vst [vmem:[#allocation3] sm:$0xff] 0.0
  $region29: #{lstm_classifier.1} parent=0 // pred_fallthru
    _
  %v29 = vld [vmem:[%s0] sm:$0xff]
  %v30 = vld [vmem:[%s0 + $0x8] sm:$0xff]
  %v31 = vld [vmem:[%s0 + $0x10] sm:$0xff]
  %v32 = vld [vmem:[%s0 + $0x18] sm:$0xff]
  %v33 = vld [vmem:[%s0 + $0x20] sm:$0xff]
  %v34 = vld [vmem:[%s0 + $0x28] sm:$0xff]
  %v35 = vld [vmem:[%s0 + $0x30] sm:$0xff]
  %v36 = vld [vmem:[%s0 + $0x38] sm:$0xff]
  %v37 = vld [vmem:[%s1] sm:$0xff]
  %v38 = vld [vmem:[%s1 + $0x8] sm:$0xff]
  %v39 = vld [vmem:[%s1 + $0x10] sm:$0xff]
  %v40 = vld [vmem:[%s1 + $0x18] sm:$0xff]
  %v41 = vld [vmem:[%s1 + $0x20] sm:$0xff]
  %v42 = vld [vmem:[%s1 + $0x28] sm:$0xff]
  %v43 = vld [vmem:[%s1 + $0x30] sm:$0xff]
  %v44 = vld [vmem:[%s1 + $0x38] sm:$0xff]
  %v45 = vld [vmem:[%s1 + $0x40] sm:$0xff]
  %v46 = vld [vmem:[%s1 + $0x48] sm:$0xff]
  %v47 = vld [vmem:[%s1 + $0x50] sm:$0xff]
  %v48 = vld [vmem:[%s1 + $0x58] sm:$0xff]
  %v49 = vld [vmem:[%s1 + $0x60] sm:$0xff]
  %v50 = vld [vmem:[%s1 + $0x68] sm:$0xff]
  %v51 = vld [vmem:[%s1 + $0x70] sm:$0xff]
  %v52 = vld [vmem:[%s1 + $0x78] sm:$0xff]
  %v53 = vld [vmem:[%s1 + $0x80] sm:$0xff]
  %v54 = vld [vmem:[%s1 + $0x88] sm:$0xff]
  %v55 = vld [vmem:[%s1 + $0x90] sm:$0xff]
  %v56 = vld [vmem:[%s1 + $0x98] sm:$0xff]
  %v57 = vld [vmem:[%s1 + $0xa0] sm:$0xff]
  %v58 = vld [vmem:[%s1 + $0xa8] sm:$0xff]
  %v59 = vld [vmem:[%s1 + $0xb0] sm:$0xff]
  %v60 = vld [vmem:[%s1 + $0xb8] sm:$0xff]
  %v61 = vld [vmem:[%s1 + $0xc0] sm:$0xff]
  %v62 = vld [vmem:[%s1 + $0xc8] sm:$0xff]
  %v63 = vld [vmem:[%s1 + $0xd0] sm:$0xff]
  %v64 = vld [vmem:[%s1 + $0xd8] sm:$0xff]
  %v65 = vld [vmem:[%s1 + $0xe0] sm:$0xff]
  %v66 = vld [vmem:[%s1 + $0xe8] sm:$0xff]
  %v67 = vld [vmem:[%s1 + $0xf0] sm:$0xff]
  %v68 = vld [vmem:[%s1 + $0xf8] sm:$0xff]
  %v69 = vld [vmem:[%s1 + $0x100] sm:$0xff]
  %v70 = vld [vmem:[%s1 + $0x108] sm:$0xff]
  %v71 = vld [vmem:[%s1 + $0x110] sm:$0xff]
  %v72 = vld [vmem:[%s1 + $0x118] sm:$0xff]
  %v73 = vld [vmem:[%s1 + $0x120] sm:$0xff]
  %v74 = vld [vmem:[%s1 + $0x128] sm:$0xff]
  %v75 = vld [vmem:[%s1 + $0x130] sm:$0xff]
  %v76 = vld [vmem:[%s1 + $0x138] sm:$0xff]
  %v77 = vld [vmem:[%s1 + $0x140] sm:$0xff]
  %v78 = vld [vmem:[%s1 + $0x148] sm:$0xff]
  %v79 = vld [vmem:[%s1 + $0x150] sm:$0xff]
  %v80 = vld [vmem:[%s1 + $0x158] sm:$0xff]
  %v81 = vld [vmem:[%s1 + $0x160] sm:$0xff]
  %v82 = vld [vmem:[%s1 + $0x168] sm:$0xff]
  %v83 = vld [vmem:[%s1 + $0x170] sm:$0xff]
  %v84 = vld [vmem:[%s1 + $0x178] sm:$0xff]
  %v85 = vld [vmem:[%s1 + $0x180] sm:$0xff]
  %v86 = vld [vmem:[%s1 + $0x188] sm:$0xff]
  %v87 = vld [vmem:[%s1 + $0x190] sm:$0xff]
  %v88 = vld [vmem:[%s1 + $0x198] sm:$0xff]
  %v89 = vld [vmem:[%s1 + $0x1a0] sm:$0xff]
  %v90 = vld [vmem:[%s1 + $0x1a8] sm:$0xff]
  %v91 = vld [vmem:[%s1 + $0x1b0] sm:$0xff]
  %v92 = vld [vmem:[%s1 + $0x1b8] sm:$0xff]
  %v93 = vld [vmem:[%s1 + $0x1c0] sm:$0xff]
  %v94 = vld [vmem:[%s1 + $0x1c8] sm:$0xff]
  %v95 = vld [vmem:[%s1 + $0x1d0] sm:$0xff]
  %v96 = vld [vmem:[%s1 + $0x1d8] sm:$0xff]
  %v97 = vld [vmem:[%s1 + $0x1e0] sm:$0xff]
  %v98 = vld [vmem:[%s1 + $0x1e8] sm:$0xff]
  %v99 = vld [vmem:[%s1 + $0x1f0] sm:$0xff]
  %v100 = vld [vmem:[%s1 + $0x1f8] sm:$0xff]
  %101 = vmatprep.subr.mxu0 %v38
  %102 = vmatpush1.msra.mxu0 %v37
  %103 = vmatprep.subr.mxu0 %v42
  %104 = vmatpush1.msra.mxu0 %v41
  %105 = vmatprep.subr.mxu0 %v46
  %106 = vmatpush1.msra.mxu0 %v45
  %107 = vmatprep.subr.mxu0 %v50
  %108 = vmatpush1.msra.mxu0 %v49
  %109 = vmatprep.subr.mxu0 %v54
  %110 = vmatpush1.msra.mxu0 %v53
  %111 = vmatprep.subr.mxu0 %v58
  %112 = vmatpush1.msra.mxu0 %v57
  %113 = vmatprep.subr.mxu0 %v62
  %114 = vmatpush1.msra.mxu0 %v61
  %115 = vmatprep.subr.mxu0 %v66
  %116 = vmatpush1.msra.mxu0 %v65
  %117 = vmatprep.subr.mxu0 %v70
  %118 = vmatpush1.msra.mxu0 %v69
  %119 = vmatprep.subr.mxu0 %v74
  %120 = vmatpush1.msra.mxu0 %v73
  %121 = vmatprep.subr.mxu0 %v78
  %122 = vmatpush1.msra.mxu0 %v77
  %123 = vmatprep.subr.mxu0 %v82
  %124 = vmatpush1.msra.mxu0 %v81
  %125 = vmatprep.subr.mxu0 %v86
  %126 = vmatpush1.msra.mxu0 %v85
  %127 = vmatprep.subr.mxu0 %v90
  %128 = vmatpush1.msra.mxu0 %v89
  %129 = vmatprep.subr.mxu0 %v94
  %130 = vmatpush1.msra.mxu0 %v93
  %131 = vmatprep.subr.mxu0 %v98
  %132 = vmatpush1.msra.mxu0 %v97
  %133 = vmatprep.subr.mxu0 0.0
  %134 = vmatpush1.msra.mxu0 0.0
  %135 = vmatprep.subr.mxu0 0.0
  %136 = vmatpush1.msra.mxu0 0.0
  %137 = vmatprep.subr.mxu0 0.0
  %138 = vmatpush1.msra.mxu0 0.0
  %139 = vmatprep.subr.mxu0 0.0
  %140 = vmatpush1.msra.mxu0 0.0
  %141 = vmatprep.subr.mxu0 0.0
  %142 = vmatpush1.msra.mxu0 0.0
  %143 = vmatprep.subr.mxu0 0.0
  %144 = vmatpush1.msra.mxu0 0.0
  %145 = vmatprep.subr.mxu0 0.0
  %146 = vmatpush1.msra.mxu0 0.0
  %147 = vmatprep.subr.mxu0 0.0
  %148 = vmatpush1.msra.mxu0 0.0
  %149 = vmatprep.subr.mxu0 0.0
  %150 = vmatpush1.msra.mxu0 0.0
  %151 = vmatprep.subr.mxu0 0.0
  %152 = vmatpush1.msra.mxu0 0.0
  %153 = vmatprep.subr.mxu0 0.0
  %154 = vmatpush1.msra.mxu0 0.0
  %155 = vmatprep.subr.mxu0 0.0
  %156 = vmatpush1.msra.mxu0 0.0
  %157 = vmatprep.subr.mxu0 0.0
  %158 = vmatpush1.msra.mxu0 0.0
  %159 = vmatprep.subr.mxu0 0.0
  %160 = vmatpush1.msra.mxu0 0.0
  %161 = vmatprep.subr.mxu0 0.0
  %162 = vmatpush1.msra.mxu0 0.0
  %163 = vmatprep.subr.mxu0 0.0
  %164 = vmatpush1.msra.mxu0 0.0
  %165 = vmatprep.mubr.f32.mxu0 0.0
  %166 = vmatmul.mubr.f32.gmra.mrb[0].mxu0 %v29
  %v167 = vpop.f32.mrb[0].mxu0
  %v168 = vadd.f32 0.0, %v167
  %v169 = vpop.f32.mrb[0].mxu0
  %v170 = vadd.f32 0.0, %v169
  %171 = vmatprep.mubr.f32.mxu0 0.0
  %172 = vmatmul.mubr.f32.gmra.mrb[0].mxu0 %v30
  %v173 = vpop.f32.mrb[0].mxu0
  %v174 = vadd.f32 0.0, %v173
  %v175 = vpop.f32.mrb[0].mxu0
  %v176 = vadd.f32 0.0, %v175
  %177 = vmatprep.mubr.f32.mxu0 0.0
  %178 = vmatmul.mubr.f32.gmra.mrb[0].mxu0 %v31
  %v179 = vpop.f32.mrb[0].mxu0
  %v180 = vadd.f32 0.0, %v179
  %v181 = vpop.f32.mrb[0].mxu0
  %v182 = vadd.f32 0.0, %v181
  %183 = vmatprep.mubr.f32.mxu0 0.0
  %184 = vmatmul.mubr.f32.gmra.mrb[0].mxu0 %v32
  %v185 = vpop.f32.mrb[0].mxu0
  %v186 = vadd.f32 0.0, %v185
  %v187 = vpop.f32.mrb[0].mxu0
  %v188 = vadd.f32 0.0, %v187
  %189 = vmatprep.mubr.f32.mxu0 0.0
  %190 = vmatmul.mubr.f32.gmra.mrb[0].mxu0 %v33
  %v191 = vpop.f32.mrb[0].mxu0
  %v192 = vadd.f32 0.0, %v191
  %v193 = vpop.f32.mrb[0].mxu0
  %v194 = vadd.f32 0.0, %v193
  %195 = vmatprep.mubr.f32.mxu0 0.0
  %196 = vmatmul.mubr.f32.gmra.mrb[0].mxu0 %v34
  %v197 = vpop.f32.mrb[0].mxu0
  %v198 = vadd.f32 0.0, %v197
  %v199 = vpop.f32.mrb[0].mxu0
  %v200 = vadd.f32 0.0, %v199
  %201 = vmatprep.mubr.f32.mxu0 0.0
  %202 = vmatmul.mubr.f32.gmra.mrb[0].mxu0 %v35
  %v203 = vpop.f32.mrb[0].mxu0
  %v204 = vadd.f32 0.0, %v203
  %v205 = vpop.f32.mrb[0].mxu0
  %v206 = vadd.f32 0.0, %v205
  %207 = vmatprep.mubr.f32.mxu0 0.0
  %208 = vmatmul.mubr.f32.gmra.mrb[0].mxu0 %v36
  %v209 = vpop.f32.mrb[0].mxu0
  %v210 = vadd.f32 0.0, %v209
  %v211 = vpop.f32.mrb[0].mxu0
  %v212 = vadd.f32 0.0, %v211
  %213 = vdwg.mxu0
  %214 = vmatprep.subr.mxu0 %v40
  %215 = vmatpush1.msra.mxu0 %v39
  %216 = vmatprep.subr.mxu0 %v44
  %217 = vmatpush1.msra.mxu0 %v43
  %218 = vmatprep.subr.mxu0 %v48
  %219 = vmatpush1.msra.mxu0 %v47
  %220 = vmatprep.subr.mxu0 %v52
  %221 = vmatpush1.msra.mxu0 %v51
  %222 = vmatprep.subr.mxu0 %v56
  %223 = vmatpush1.msra.mxu0 %v55
  %224 = vmatprep.subr.mxu0 %v60
  %225 = vmatpush1.msra.mxu0 %v59
  %226 = vmatprep.subr.mxu0 %v64
  %227 = vmatpush1.msra.mxu0 %v63
  %228 = vmatprep.subr.mxu0 %v68
  %229 = vmatpush1.msra.mxu0 %v67
  %230 = vmatprep.subr.mxu0 %v72
  %231 = vmatpush1.msra.mxu0 %v71
  %232 = vmatprep.subr.mxu0 %v76
  %233 = vmatpush1.msra.mxu0 %v75
  %234 = vmatprep.subr.mxu0 %v80
  %235 = vmatpush1.msra.mxu0 %v79
  %236 = vmatprep.subr.mxu0 %v84
  %237 = vmatpush1.msra.mxu0 %v83
  %238 = vmatprep.subr.mxu0 %v88
  %239 = vmatpush1.msra.mxu0 %v87
  %240 = vmatprep.subr.mxu0 %v92
  %241 = vmatpush1.msra.mxu0 %v91
  %242 = vmatprep.subr.mxu0 %v96
  %243 = vmatpush1.msra.mxu0 %v95
  %244 = vmatprep.subr.mxu0 %v100
  %245 = vmatpush1.msra.mxu0 %v99
  %246 = vmatprep.subr.mxu0 0.0
  %247 = vmatpush1.msra.mxu0 0.0
  %248 = vmatprep.subr.mxu0 0.0
  %249 = vmatpush1.msra.mxu0 0.0
  %250 = vmatprep.subr.mxu0 0.0
  %251 = vmatpush1.msra.mxu0 0.0
  %252 = vmatprep.subr.mxu0 0.0
  %253 = vmatpush1.msra.mxu0 0.0
  %254 = vmatprep.subr.mxu0 0.0
  %255 = vmatpush1.msra.mxu0 0.0
  %256 = vmatprep.subr.mxu0 0.0
  %257 = vmatpush1.msra.mxu0 0.0
  %258 = vmatprep.subr.mxu0 0.0
  %259 = vmatpush1.msra.mxu0 0.0
  %260 = vmatprep.subr.mxu0 0.0
  %261 = vmatpush1.msra.mxu0 0.0
  %262 = vmatprep.subr.mxu0 0.0
  %263 = vmatpush1.msra.mxu0 0.0
  %264 = vmatprep.subr.mxu0 0.0
  %265 = vmatpush1.msra.mxu0 0.0
  %266 = vmatprep.subr.mxu0 0.0
  %267 = vmatpush1.msra.mxu0 0.0
  %268 = vmatprep.subr.mxu0 0.0
  %269 = vmatpush1.msra.mxu0 0.0
  %270 = vmatprep.subr.mxu0 0.0
  %271 = vmatpush1.msra.mxu0 0.0
  %272 = vmatprep.subr.mxu0 0.0
  %273 = vmatpush1.msra.mxu0 0.0
  %274 = vmatprep.subr.mxu0 0.0
  %275 = vmatpush1.msra.mxu0 0.0
  %276 = vmatprep.subr.mxu0 0.0
  %277 = vmatpush1.msra.mxu0 0.0
  %278 = vmatprep.mubr.f32.mxu0 0.0
  %279 = vmatmul.mubr.f32.gmra.mrb[0].mxu0 %v29
  %v280 = vpop.f32.mrb[0].mxu0
  %v281 = vadd.f32 0.0, %v280
  %v282 = vpop.f32.mrb[0].mxu0
  %v283 = vadd.f32 0.0, %v282
  %284 = vmatprep.mubr.f32.mxu0 0.0
  %285 = vmatmul.mubr.f32.gmra.mrb[0].mxu0 %v30
  %v286 = vpop.f32.mrb[0].mxu0
  %v287 = vadd.f32 0.0, %v286
  %v288 = vpop.f32.mrb[0].mxu0
  %v289 = vadd.f32 0.0, %v288
  %290 = vmatprep.mubr.f32.mxu0 0.0
  %291 = vmatmul.mubr.f32.gmra.mrb[0].mxu0 %v31
  %v292 = vpop.f32.mrb[0].mxu0
  %v293 = vadd.f32 0.0, %v292
  %v294 = vpop.f32.mrb[0].mxu0
  %v295 = vadd.f32 0.0, %v294
  %296 = vmatprep.mubr.f32.mxu0 0.0
  %297 = vmatmul.mubr.f32.gmra.mrb[0].mxu0 %v32
  %v298 = vpop.f32.mrb[0].mxu0
  %v299 = vadd.f32 0.0, %v298
  %v300 = vpop.f32.mrb[0].mxu0
  %v301 = vadd.f32 0.0, %v300
  %302 = vmatprep.mubr.f32.mxu0 0.0
  %303 = vmatmul.mubr.f32.gmra.mrb[0].mxu0 %v33
  %v304 = vpop.f32.mrb[0].mxu0
  %v305 = vadd.f32 0.0, %v304
  %v306 = vpop.f32.mrb[0].mxu0
  %v307 = vadd.f32 0.0, %v306
  %308 = vmatprep.mubr.f32.mxu0 0.0
  %309 = vmatmul.mubr.f32.gmra.mrb[0].mxu0 %v34
  %v310 = vpop.f32.mrb[0].mxu0
  %v311 = vadd.f32 0.0, %v310
  %v312 = vpop.f32.mrb[0].mxu0
  %v313 = vadd.f32 0.0, %v312
  %314 = vmatprep.mubr.f32.mxu0 0.0
  %315 = vmatmul.mubr.f32.gmra.mrb[0].mxu0 %v35
  %v316 = vpop.f32.mrb[0].mxu0
  %v317 = vadd.f32 0.0, %v316
  %v318 = vpop.f32.mrb[0].mxu0
  %v319 = vadd.f32 0.0, %v318
  %320 = vmatprep.mubr.f32.mxu0 0.0
  %321 = vmatmul.mubr.f32.gmra.mrb[0].mxu0 %v36
  %v322 = vpop.f32.mrb[0].mxu0
  %v323 = vadd.f32 0.0, %v322
  %v324 = vpop.f32.mrb[0].mxu0
  %v325 = vadd.f32 0.0, %v324
  %326 = vdwg.mxu0
  %327 = vst [vmem:[#allocation4] sm:$0xff] %v168
  %328 = vst [vmem:[#allocation4 + $0x8] sm:$0xff] %v170
  %329 = vst [vmem:[#allocation4 + $0x10] sm:$0xff] %v281
  %330 = vst [vmem:[#allocation4 + $0x18] sm:$0xff] %v283
  %331 = vst [vmem:[#allocation4 + $0x20] sm:$0xff] %v174
  %332 = vst [vmem:[#allocation4 + $0x28] sm:$0xff] %v176
  %333 = vst [vmem:[#allocation4 + $0x30] sm:$0xff] %v287
  %334 = vst [vmem:[#allocation4 + $0x38] sm:$0xff] %v289
  %335 = vst [vmem:[#allocation4 + $0x40] sm:$0xff] %v180
  %336 = vst [vmem:[#allocation4 + $0x48] sm:$0xff] %v182
  %337 = vst [vmem:[#allocation4 + $0x50] sm:$0xff] %v293
  %338 = vst [vmem:[#allocation4 + $0x58] sm:$0xff] %v295
  %339 = vst [vmem:[#allocation4 + $0x60] sm:$0xff] %v186
  %340 = vst [vmem:[#allocation4 + $0x68] sm:$0xff] %v188
  %341 = vst [vmem:[#allocation4 + $0x70] sm:$0xff] %v299
  %342 = vst [vmem:[#allocation4 + $0x78] sm:$0xff] %v301
  %343 = vst [vmem:[#allocation4 + $0x80] sm:$0xff] %v192
  %344 = vst [vmem:[#allocation4 + $0x88] sm:$0xff] %v194
  %345 = vst [vmem:[#allocation4 + $0x90] sm:$0xff] %v305
  %346 = vst [vmem:[#allocation4 + $0x98] sm:$0xff] %v307
  %347 = vst [vmem:[#allocation4 + $0xa0] sm:$0xff] %v198
  %348 = vst [vmem:[#allocation4 + $0xa8] sm:$0xff] %v200
  %349 = vst [vmem:[#allocation4 + $0xb0] sm:$0xff] %v311
  %350 = vst [vmem:[#allocation4 + $0xb8] sm:$0xff] %v313
  %351 = vst [vmem:[#allocation4 + $0xc0] sm:$0xff] %v204
  %352 = vst [vmem:[#allocation4 + $0xc8] sm:$0xff] %v206
  %353 = vst [vmem:[#allocation4 + $0xd0] sm:$0xff] %v317
  %354 = vst [vmem:[#allocation4 + $0xd8] sm:$0xff] %v319
  %355 = vst [vmem:[#allocation4 + $0xe0] sm:$0xff] %v210
  %356 = vst [vmem:[#allocation4 + $0xe8] sm:$0xff] %v212
  %357 = vst [vmem:[#allocation4 + $0xf0] sm:$0xff] %v323
  %358 = vst [vmem:[#allocation4 + $0xf8] sm:$0xff] %v325
  %v359 = vld [vmem:[%s3] sm:$0xf]
  %v361 = vlaneseq
  %v362 = vshrl.u32 %v361, 7
  %v363 = vsub.s32 0, %v362
  %v364 = vrot.slane %v359, %v363
  %v365 = vlaneseq
  %v366 = vshrl.u32 %v365, 7
  %v367 = vsub.s32 1, %v366
  %v368 = vrot.slane %v359, %v367
  %v369 = vlaneseq
  %v370 = vshrl.u32 %v369, 7
  %v371 = vsub.s32 2, %v370
  %v372 = vrot.slane %v359, %v371
  %v373 = vlaneseq
  %v374 = vshrl.u32 %v373, 7
  %v375 = vsub.s32 3, %v374
  %v376 = vrot.slane %v359, %v375
  %v381 = vld [vmem:[#allocation2] sm:$0xff]
  %v382 = vld [vmem:[#allocation3] sm:$0xff]
  %v383 = vld [vmem:[#allocation4] sm:$0xff]
  %v384 = vld [vmem:[#allocation4 + $0x8] sm:$0xff]
  %v385 = vld [vmem:[#allocation4 + $0x10] sm:$0xff]
  %v386 = vld [vmem:[#allocation4 + $0x18] sm:$0xff]
  %v387 = vld [vmem:[%s2] sm:$0xff]
  %v388 = vld [vmem:[%s2 + $0x8] sm:$0xff]
  %v389 = vld [vmem:[%s2 + $0x10] sm:$0xff]
  %v390 = vld [vmem:[%s2 + $0x18] sm:$0xff]
  %v391 = vld [vmem:[%s2 + $0x20] sm:$0xff]
  %v392 = vld [vmem:[%s2 + $0x28] sm:$0xff]
  %v393 = vld [vmem:[%s2 + $0x30] sm:$0xff]
  %v394 = vld [vmem:[%s2 + $0x38] sm:$0xff]
  %v395 = vld [vmem:[%s2 + $0x40] sm:$0xff]
  %v396 = vld [vmem:[%s2 + $0x48] sm:$0xff]
  %v397 = vld [vmem:[%s2 + $0x50] sm:$0xff]
  %v398 = vld [vmem:[%s2 + $0x58] sm:$0xff]
  %v399 = vld [vmem:[%s2 + $0x60] sm:$0xff]
  %v400 = vld [vmem:[%s2 + $0x68] sm:$0xff]
  %v401 = vld [vmem:[%s2 + $0x70] sm:$0xff]
  %v402 = vld [vmem:[%s2 + $0x78] sm:$0xff]
  %v403 = vld [vmem:[%s2 + $0x80] sm:$0xff]
  %v404 = vld [vmem:[%s2 + $0x88] sm:$0xff]
  %v405 = vld [vmem:[%s2 + $0x90] sm:$0xff]
  %v406 = vld [vmem:[%s2 + $0x98] sm:$0xff]
  %v407 = vld [vmem:[%s2 + $0xa0] sm:$0xff]
  %v408 = vld [vmem:[%s2 + $0xa8] sm:$0xff]
  %v409 = vld [vmem:[%s2 + $0xb0] sm:$0xff]
  %v410 = vld [vmem:[%s2 + $0xb8] sm:$0xff]
  %v411 = vld [vmem:[%s2 + $0xc0] sm:$0xff]
  %v412 = vld [vmem:[%s2 + $0xc8] sm:$0xff]
  %v413 = vld [vmem:[%s2 + $0xd0] sm:$0xff]
  %v414 = vld [vmem:[%s2 + $0xd8] sm:$0xff]
  %v415 = vld [vmem:[%s2 + $0xe0] sm:$0xff]
  %v416 = vld [vmem:[%s2 + $0xe8] sm:$0xff]
  %v417 = vld [vmem:[%s2 + $0xf0] sm:$0xff]
  %v418 = vld [vmem:[%s2 + $0xf8] sm:$0xff]
  %v419 = vld [vmem:[%s2 + $0x100] sm:$0xff]
  %v420 = vld [vmem:[%s2 + $0x108] sm:$0xff]
  %v421 = vld [vmem:[%s2 + $0x110] sm:$0xff]
  %v422 = vld [vmem:[%s2 + $0x118] sm:$0xff]
  %v423 = vld [vmem:[%s2 + $0x120] sm:$0xff]
  %v424 = vld [vmem:[%s2 + $0x128] sm:$0xff]
  %v425 = vld [vmem:[%s2 + $0x130] sm:$0xff]
  %v426 = vld [vmem:[%s2 + $0x138] sm:$0xff]
  %v427 = vld [vmem:[%s2 + $0x140] sm:$0xff]
  %v428 = vld [vmem:[%s2 + $0x148] sm:$0xff]
  %v429 = vld [vmem:[%s2 + $0x150] sm:$0xff]
  %v430 = vld [vmem:[%s2 + $0x158] sm:$0xff]
  %v431 = vld [vmem:[%s2 + $0x160] sm:$0xff]
  %v432 = vld [vmem:[%s2 + $0x168] sm:$0xff]
  %v433 = vld [vmem:[%s2 + $0x170] sm:$0xff]
  %v434 = vld [vmem:[%s2 + $0x178] sm:$0xff]
  %v435 = vld [vmem:[%s2 + $0x180] sm:$0xff]
  %v436 = vld [vmem:[%s2 + $0x188] sm:$0xff]
  %v437 = vld [vmem:[%s2 + $0x190] sm:$0xff]
  %v438 = vld [vmem:[%s2 + $0x198] sm:$0xff]
  %v439 = vld [vmem:[%s2 + $0x1a0] sm:$0xff]
  %v440 = vld [vmem:[%s2 + $0x1a8] sm:$0xff]
  %v441 = vld [vmem:[%s2 + $0x1b0] sm:$0xff]
  %v442 = vld [vmem:[%s2 + $0x1b8] sm:$0xff]
  %v443 = vld [vmem:[%s2 + $0x1c0] sm:$0xff]
  %v444 = vld [vmem:[%s2 + $0x1c8] sm:$0xff]
  %v445 = vld [vmem:[%s2 + $0x1d0] sm:$0xff]
  %v446 = vld [vmem:[%s2 + $0x1d8] sm:$0xff]
  %v447 = vld [vmem:[%s2 + $0x1e0] sm:$0xff]
  %v448 = vld [vmem:[%s2 + $0x1e8] sm:$0xff]
  %v449 = vld [vmem:[%s2 + $0x1f0] sm:$0xff]
  %v450 = vld [vmem:[%s2 + $0x1f8] sm:$0xff]
  %451 = vmatprep.subr.mxu0 %v388
  %452 = vmatpush1.msra.mxu0 %v387
  %453 = vmatprep.subr.mxu0 %v392
  %454 = vmatpush1.msra.mxu0 %v391
  %455 = vmatprep.subr.mxu0 %v396
  %456 = vmatpush1.msra.mxu0 %v395
  %457 = vmatprep.subr.mxu0 %v400
  %458 = vmatpush1.msra.mxu0 %v399
  %459 = vmatprep.subr.mxu0 %v404
  %460 = vmatpush1.msra.mxu0 %v403
  %461 = vmatprep.subr.mxu0 %v408
  %462 = vmatpush1.msra.mxu0 %v407
  %463 = vmatprep.subr.mxu0 %v412
  %464 = vmatpush1.msra.mxu0 %v411
  %465 = vmatprep.subr.mxu0 %v416
  %466 = vmatpush1.msra.mxu0 %v415
  %467 = vmatprep.subr.mxu0 %v420
  %468 = vmatpush1.msra.mxu0 %v419
  %469 = vmatprep.subr.mxu0 %v424
  %470 = vmatpush1.msra.mxu0 %v423
  %471 = vmatprep.subr.mxu0 %v428
  %472 = vmatpush1.msra.mxu0 %v427
  %473 = vmatprep.subr.mxu0 %v432
  %474 = vmatpush1.msra.mxu0 %v431
  %475 = vmatprep.subr.mxu0 %v436
  %476 = vmatpush1.msra.mxu0 %v435
  %477 = vmatprep.subr.mxu0 %v440
  %478 = vmatpush1.msra.mxu0 %v439
  %479 = vmatprep.subr.mxu0 %v444
  %480 = vmatpush1.msra.mxu0 %v443
  %481 = vmatprep.subr.mxu0 %v448
  %482 = vmatpush1.msra.mxu0 %v447
  %483 = vmatprep.subr.mxu0 0.0
  %484 = vmatpush1.msra.mxu0 0.0
  %485 = vmatprep.subr.mxu0 0.0
  %486 = vmatpush1.msra.mxu0 0.0
  %487 = vmatprep.subr.mxu0 0.0
  %488 = vmatpush1.msra.mxu0 0.0
  %489 = vmatprep.subr.mxu0 0.0
  %490 = vmatpush1.msra.mxu0 0.0
  %491 = vmatprep.subr.mxu0 0.0
  %492 = vmatpush1.msra.mxu0 0.0
  %493 = vmatprep.subr.mxu0 0.0
  %494 = vmatpush1.msra.mxu0 0.0
  %495 = vmatprep.subr.mxu0 0.0
  %496 = vmatpush1.msra.mxu0 0.0
  %497 = vmatprep.subr.mxu0 0.0
  %498 = vmatpush1.msra.mxu0 0.0
  %499 = vmatprep.subr.mxu0 0.0
  %500 = vmatpush1.msra.mxu0 0.0
  %501 = vmatprep.subr.mxu0 0.0
  %502 = vmatpush1.msra.mxu0 0.0
  %503 = vmatprep.subr.mxu0 0.0
  %504 = vmatpush1.msra.mxu0 0.0
  %505 = vmatprep.subr.mxu0 0.0
  %506 = vmatpush1.msra.mxu0 0.0
  %507 = vmatprep.subr.mxu0 0.0
  %508 = vmatpush1.msra.mxu0 0.0
  %509 = vmatprep.subr.mxu0 0.0
  %510 = vmatpush1.msra.mxu0 0.0
  %511 = vmatprep.subr.mxu0 0.0
  %512 = vmatpush1.msra.mxu0 0.0
  %513 = vmatprep.subr.mxu0 0.0
  %514 = vmatpush1.msra.mxu0 0.0
  %515 = vmatprep.mubr.f32.mxu0 0.0
  %516 = vmatmul.mubr.f32.gmra.mrb[0].mxu0 %v381
  %v517 = vpop.f32.mrb[0].mxu0
  %v518 = vadd.f32 0.0, %v517
  %v519 = vpop.f32.mrb[0].mxu0
  %v520 = vadd.f32 0.0, %v519
  %521 = vdwg.mxu0
  %522 = vmatprep.subr.mxu0 %v390
  %523 = vmatpush1.msra.mxu0 %v389
  %524 = vmatprep.subr.mxu0 %v394
  %525 = vmatpush1.msra.mxu0 %v393
  %526 = vmatprep.subr.mxu0 %v398
  %527 = vmatpush1.msra.mxu0 %v397
  %528 = vmatprep.subr.mxu0 %v402
  %529 = vmatpush1.msra.mxu0 %v401
  %530 = vmatprep.subr.mxu0 %v406
  %531 = vmatpush1.msra.mxu0 %v405
  %532 = vmatprep.subr.mxu0 %v410
  %533 = vmatpush1.msra.mxu0 %v409
  %534 = vmatprep.subr.mxu0 %v414
  %535 = vmatpush1.msra.mxu0 %v413
  %536 = vmatprep.subr.mxu0 %v418
  %537 = vmatpush1.msra.mxu0 %v417
  %538 = vmatprep.subr.mxu0 %v422
  %539 = vmatpush1.msra.mxu0 %v421
  %540 = vmatprep.subr.mxu0 %v426
  %541 = vmatpush1.msra.mxu0 %v425
  %542 = vmatprep.subr.mxu0 %v430
  %543 = vmatpush1.msra.mxu0 %v429
  %544 = vmatprep.subr.mxu0 %v434
  %545 = vmatpush1.msra.mxu0 %v433
  %546 = vmatprep.subr.mxu0 %v438
  %547 = vmatpush1.msra.mxu0 %v437
  %548 = vmatprep.subr.mxu0 %v442
  %549 = vmatpush1.msra.mxu0 %v441
  %550 = vmatprep.subr.mxu0 %v446
  %551 = vmatpush1.msra.mxu0 %v445
  %552 = vmatprep.subr.mxu0 %v450
  %553 = vmatpush1.msra.mxu0 %v449
  %554 = vmatprep.subr.mxu0 0.0
  %555 = vmatpush1.msra.mxu0 0.0
  %556 = vmatprep.subr.mxu0 0.0
  %557 = vmatpush1.msra.mxu0 0.0
  %558 = vmatprep.subr.mxu0 0.0
  %559 = vmatpush1.msra.mxu0 0.0
  %560 = vmatprep.subr.mxu0 0.0
  %561 = vmatpush1.msra.mxu0 0.0
  %562 = vmatprep.subr.mxu0 0.0
  %563 = vmatpush1.msra.mxu0 0.0
  %564 = vmatprep.subr.mxu0 0.0
  %565 = vmatpush1.msra.mxu0 0.0
  %566 = vmatprep.subr.mxu0 0.0
  %567 = vmatpush1.msra.mxu0 0.0
  %568 = vmatprep.subr.mxu0 0.0
  %569 = vmatpush1.msra.mxu0 0.0
  %570 = vmatprep.subr.mxu0 0.0
  %571 = vmatpush1.msra.mxu0 0.0
  %572 = vmatprep.subr.mxu0 0.0
  %573 = vmatpush1.msra.mxu0 0.0
  %574 = vmatprep.subr.mxu0 0.0
  %575 = vmatpush1.msra.mxu0 0.0
  %576 = vmatprep.subr.mxu0 0.0
  %577 = vmatpush1.msra.mxu0 0.0
  %578 = vmatprep.subr.mxu0 0.0
  %579 = vmatpush1.msra.mxu0 0.0
  %580 = vmatprep.subr.mxu0 0.0
  %581 = vmatpush1.msra.mxu0 0.0
  %582 = vmatprep.subr.mxu0 0.0
  %583 = vmatpush1.msra.mxu0 0.0
  %584 = vmatprep.subr.mxu0 0.0
  %585 = vmatpush1.msra.mxu0 0.0
  %586 = vmatprep.mubr.f32.mxu0 0.0
  %587 = vmatmul.mubr.f32.gmra.mrb[0].mxu0 %v381
  %v588 = vpop.f32.mrb[0].mxu0
  %v589 = vadd.f32 0.0, %v588
  %v590 = vpop.f32.mrb[0].mxu0
  %v591 = vadd.f32 0.0, %v590
  %592 = vdwg.mxu0
  %v593 = vadd.f32 %v383, %v518
  %v594 = vadd.f32 %v384, %v520
  %v595 = vadd.f32 %v385, %v589
  %v596 = vadd.f32 %v386, %v591
  %v597 = vadd.f32 %v593, %v364
  %v598 = vadd.f32 %v594, %v368
  %v599 = vadd.f32 %v595, %v372
  %v600 = vadd.f32 %v596, %v376
  %v601 = vxor.u32 %v597, 2147483648
  %v602 = vmul.f32 %v601, 1.442695
  %v603 = vpow.pop %v602
  %v604 = vadd.f32 %v603, 1.0
  %v605 = vrcp.pop %v604
  %v606 = vmul.f32 1.0, %v605
  %v607 = vxor.u32 %v598, 2147483648
  %v608 = vmul.f32 %v607, 1.442695
  %v609 = vpow.pop %v608
  %v610 = vadd.f32 %v609, 1.0
  %v611 = vrcp.pop %v610
  %v612 = vmul.f32 1.0, %v611
  %v613 = vtanh.pop %v599
  %v614 = vxor.u32 %v600, 2147483648
  %v615 = vmul.f32 %v614, 1.442695
  %v616 = vpow.pop %v615
  %v617 = vadd.f32 %v616, 1.0
  %v618 = vrcp.pop %v617
  %v619 = vmul.f32 1.0, %v618
  %v620 = vmul.f32 %v612, %v382
  %v621 = vmul.f32 %v606, %v613
  %v622 = vadd.f32 %v620, %v621
  %v623 = vtanh.pop %v622
  %v624 = vmul.f32 %v619, %v623
  %s625 = scalar_lea.vmem [#allocation4], 32
  %v626 = vld [vmem:[%s625] sm:$0xff]
  %v627 = vld [vmem:[%s625 + $0x8] sm:$0xff]
  %v628 = vld [vmem:[%s625 + $0x10] sm:$0xff]
  %v629 = vld [vmem:[%s625 + $0x18] sm:$0xff]
  %630 = vmatprep.subr.mxu0 %v388
  %631 = vmatpush1.msra.mxu0 %v387
  %632 = vmatprep.subr.mxu0 %v392
  %633 = vmatpush1.msra.mxu0 %v391
  %634 = vmatprep.subr.mxu0 %v396
  %635 = vmatpush1.msra.mxu0 %v395
  %636 = vmatprep.subr.mxu0 %v400
  %637 = vmatpush1.msra.mxu0 %v399
  %638 = vmatprep.subr.mxu0 %v404
  %639 = vmatpush1.msra.mxu0 %v403
  %640 = vmatprep.subr.mxu0 %v408
  %641 = vmatpush1.msra.mxu0 %v407
  %642 = vmatprep.subr.mxu0 %v412
  %643 = vmatpush1.msra.mxu0 %v411
  %644 = vmatprep.subr.mxu0 %v416
  %645 = vmatpush1.msra.mxu0 %v415
  %646 = vmatprep.subr.mxu0 %v420
  %647 = vmatpush1.msra.mxu0 %v419
  %648 = vmatprep.subr.mxu0 %v424
  %649 = vmatpush1.msra.mxu0 %v423
  %650 = vmatprep.subr.mxu0 %v428
  %651 = vmatpush1.msra.mxu0 %v427
  %652 = vmatprep.subr.mxu0 %v432
  %653 = vmatpush1.msra.mxu0 %v431
  %654 = vmatprep.subr.mxu0 %v436
  %655 = vmatpush1.msra.mxu0 %v435
  %656 = vmatprep.subr.mxu0 %v440
  %657 = vmatpush1.msra.mxu0 %v439
  %658 = vmatprep.subr.mxu0 %v444
  %659 = vmatpush1.msra.mxu0 %v443
  %660 = vmatprep.subr.mxu0 %v448
  %661 = vmatpush1.msra.mxu0 %v447
  %662 = vmatprep.subr.mxu0 0.0
  %663 = vmatpush1.msra.mxu0 0.0
  %664 = vmatprep.subr.mxu0 0.0
  %665 = vmatpush1.msra.mxu0 0.0
  %666 = vmatprep.subr.mxu0 0.0
  %667 = vmatpush1.msra.mxu0 0.0
  %668 = vmatprep.subr.mxu0 0.0
  %669 = vmatpush1.msra.mxu0 0.0
  %670 = vmatprep.subr.mxu0 0.0
  %671 = vmatpush1.msra.mxu0 0.0
  %672 = vmatprep.subr.mxu0 0.0
  %673 = vmatpush1.msra.mxu0 0.0
  %674 = vmatprep.subr.mxu0 0.0
  %675 = vmatpush1.msra.mxu0 0.0
  %676 = vmatprep.subr.mxu0 0.0
  %677 = vmatpush1.msra.mxu0 0.0
  %678 = vmatprep.subr.mxu0 0.0
  %679 = vmatpush1.msra.mxu0 0.0
  %680 = vmatprep.subr.mxu0 0.0
  %681 = vmatpush1.msra.mxu0 0.0
  %682 = vmatprep.subr.mxu0 0.0
  %683 = vmatpush1.msra.mxu0 0.0
  %684 = vmatprep.subr.mxu0 0.0
  %685 = vmatpush1.msra.mxu0 0.0
  %686 = vmatprep.subr.mxu0 0.0
  %687 = vmatpush1.msra.mxu0 0.0
  %688 = vmatprep.subr.mxu0 0.0
  %689 = vmatpush1.msra.mxu0 0.0
  %690 = vmatprep.subr.mxu0 0.0
  %691 = vmatpush1.msra.mxu0 0.0
  %692 = vmatprep.subr.mxu0 0.0
  %693 = vmatpush1.msra.mxu0 0.0
  %694 = vmatprep.mubr.f32.mxu0 0.0
  %695 = vmatmul.mubr.f32.gmra.mrb[0].mxu0 %v624
  %v696 = vpop.f32.mrb[0].mxu0
  %v697 = vadd.f32 0.0, %v696
  %v698 = vpop.f32.mrb[0].mxu0
  %v699 = vadd.f32 0.0, %v698
  %700 = vdwg.mxu0
  %701 = vmatprep.subr.mxu0 %v390
  %702 = vmatpush1.msra.mxu0 %v389
  %703 = vmatprep.subr.mxu0 %v394
  %704 = vmatpush1.msra.mxu0 %v393
  %705 = vmatprep.subr.mxu0 %v398
  %706 = vmatpush1.msra.mxu0 %v397
  %707 = vmatprep.subr.mxu0 %v402
  %708 = vmatpush1.msra.mxu0 %v401
  %709 = vmatprep.subr.mxu0 %v406
  %710 = vmatpush1.msra.mxu0 %v405
  %711 = vmatprep.subr.mxu0 %v410
  %712 = vmatpush1.msra.mxu0 %v409
  %713 = vmatprep.subr.mxu0 %v414
  %714 = vmatpush1.msra.mxu0 %v413
  %715 = vmatprep.subr.mxu0 %v418
  %716 = vmatpush1.msra.mxu0 %v417
  %717 = vmatprep.subr.mxu0 %v422
  %718 = vmatpush1.msra.mxu0 %v421
  %719 = vmatprep.subr.mxu0 %v426
  %720 = vmatpush1.msra.mxu0 %v425
  %721 = vmatprep.subr.mxu0 %v430
  %722 = vmatpush1.msra.mxu0 %v429
  %723 = vmatprep.subr.mxu0 %v434
  %724 = vmatpush1.msra.mxu0 %v433
  %725 = vmatprep.subr.mxu0 %v438
  %726 = vmatpush1.msra.mxu0 %v437
  %727 = vmatprep.subr.mxu0 %v442
  %728 = vmatpush1.msra.mxu0 %v441
  %729 = vmatprep.subr.mxu0 %v446
  %730 = vmatpush1.msra.mxu0 %v445
  %731 = vmatprep.subr.mxu0 %v450
  %732 = vmatpush1.msra.mxu0 %v449
  %733 = vmatprep.subr.mxu0 0.0
  %734 = vmatpush1.msra.mxu0 0.0
  %735 = vmatprep.subr.mxu0 0.0
  %736 = vmatpush1.msra.mxu0 0.0
  %737 = vmatprep.subr.mxu0 0.0
  %738 = vmatpush1.msra.mxu0 0.0
  %739 = vmatprep.subr.mxu0 0.0
  %740 = vmatpush1.msra.mxu0 0.0
  %741 = vmatprep.subr.mxu0 0.0
  %742 = vmatpush1.msra.mxu0 0.0
  %743 = vmatprep.subr.mxu0 0.0
  %744 = vmatpush1.msra.mxu0 0.0
  %745 = vmatprep.subr.mxu0 0.0
  %746 = vmatpush1.msra.mxu0 0.0
  %747 = vmatprep.subr.mxu0 0.0
  %748 = vmatpush1.msra.mxu0 0.0
  %749 = vmatprep.subr.mxu0 0.0
  %750 = vmatpush1.msra.mxu0 0.0
  %751 = vmatprep.subr.mxu0 0.0
  %752 = vmatpush1.msra.mxu0 0.0
  %753 = vmatprep.subr.mxu0 0.0
  %754 = vmatpush1.msra.mxu0 0.0
  %755 = vmatprep.subr.mxu0 0.0
  %756 = vmatpush1.msra.mxu0 0.0
  %757 = vmatprep.subr.mxu0 0.0
  %758 = vmatpush1.msra.mxu0 0.0
  %759 = vmatprep.subr.mxu0 0.0
  %760 = vmatpush1.msra.mxu0 0.0
  %761 = vmatprep.subr.mxu0 0.0
  %762 = vmatpush1.msra.mxu0 0.0
  %763 = vmatprep.subr.mxu0 0.0
  %764 = vmatpush1.msra.mxu0 0.0
  %765 = vmatprep.mubr.f32.mxu0 0.0
  %766 = vmatmul.mubr.f32.gmra.mrb[0].mxu0 %v624
  %v767 = vpop.f32.mrb[0].mxu0
  %v768 = vadd.f32 0.0, %v767
  %v769 = vpop.f32.mrb[0].mxu0
  %v770 = vadd.f32 0.0, %v769
  %771 = vdwg.mxu0
  %v772 = vadd.f32 %v626, %v697
  %v773 = vadd.f32 %v627, %v699
  %v774 = vadd.f32 %v628, %v768
  %v775 = vadd.f32 %v629, %v770
  %v776 = vadd.f32 %v772, %v364
  %v777 = vadd.f32 %v773, %v368
  %v778 = vadd.f32 %v774, %v372
  %v779 = vadd.f32 %v775, %v376
  %v780 = vxor.u32 %v776, 2147483648
  %v781 = vmul.f32 %v780, 1.442695
  %v782 = vpow.pop %v781
  %v783 = vadd.f32 %v782, 1.0
  %v784 = vrcp.pop %v783
  %v785 = vmul.f32 1.0, %v784
  %v786 = vxor.u32 %v777, 2147483648
  %v787 = vmul.f32 %v786, 1.442695
  %v788 = vpow.pop %v787
  %v789 = vadd.f32 %v788, 1.0
  %v790 = vrcp.pop %v789
  %v791 = vmul.f32 1.0, %v790
  %v792 = vtanh.pop %v778
  %v793 = vxor.u32 %v779, 2147483648
  %v794 = vmul.f32 %v793, 1.442695
  %v795 = vpow.pop %v794
  %v796 = vadd.f32 %v795, 1.0
  %v797 = vrcp.pop %v796
  %v798 = vmul.f32 1.0, %v797
  %v799 = vmul.f32 %v791, %v622
  %v800 = vmul.f32 %v785, %v792
  %v801 = vadd.f32 %v799, %v800
  %v802 = vtanh.pop %v801
  %v803 = vmul.f32 %v798, %v802
  %s804 = scalar_lea.vmem [#allocation4], 64
  %v805 = vld [vmem:[%s804] sm:$0xff]
  %v806 = vld [vmem:[%s804 + $0x8] sm:$0xff]
  %v807 = vld [vmem:[%s804 + $0x10] sm:$0xff]
  %v808 = vld [vmem:[%s804 + $0x18] sm:$0xff]
  %809 = vmatprep.subr.mxu0 %v388
  %810 = vmatpush1.msra.mxu0 %v387
  %811 = vmatprep.subr.mxu0 %v392
  %812 = vmatpush1.msra.mxu0 %v391
  %813 = vmatprep.subr.mxu0 %v396
  %814 = vmatpush1.msra.mxu0 %v395
  %815 = vmatprep.subr.mxu0 %v400
  %816 = vmatpush1.msra.mxu0 %v399
  %817 = vmatprep.subr.mxu0 %v404
  %818 = vmatpush1.msra.mxu0 %v403
  %819 = vmatprep.subr.mxu0 %v408
  %820 = vmatpush1.msra.mxu0 %v407
  %821 = vmatprep.subr.mxu0 %v412
  %822 = vmatpush1.msra.mxu0 %v411
  %823 = vmatprep.subr.mxu0 %v416
  %824 = vmatpush1.msra.mxu0 %v415
  %825 = vmatprep.subr.mxu0 %v420
  %826 = vmatpush1.msra.mxu0 %v419
  %827 = vmatprep.subr.mxu0 %v424
  %828 = vmatpush1.msra.mxu0 %v423
  %829 = vmatprep.subr.mxu0 %v428
  %830 = vmatpush1.msra.mxu0 %v427
  %831 = vmatprep.subr.mxu0 %v432
  %832 = vmatpush1.msra.mxu0 %v431
  %833 = vmatprep.subr.mxu0 %v436
  %834 = vmatpush1.msra.mxu0 %v435
  %835 = vmatprep.subr.mxu0 %v440
  %836 = vmatpush1.msra.mxu0 %v439
  %837 = vmatprep.subr.mxu0 %v444
  %838 = vmatpush1.msra.mxu0 %v443
  %839 = vmatprep.subr.mxu0 %v448
  %840 = vmatpush1.msra.mxu0 %v447
  %841 = vmatprep.subr.mxu0 0.0
  %842 = vmatpush1.msra.mxu0 0.0
  %843 = vmatprep.subr.mxu0 0.0
  %844 = vmatpush1.msra.mxu0 0.0
  %845 = vmatprep.subr.mxu0 0.0
  %846 = vmatpush1.msra.mxu0 0.0
  %847 = vmatprep.subr.mxu0 0.0
  %848 = vmatpush1.msra.mxu0 0.0
  %849 = vmatprep.subr.mxu0 0.0
  %850 = vmatpush1.msra.mxu0 0.0
  %851 = vmatprep.subr.mxu0 0.0
  %852 = vmatpush1.msra.mxu0 0.0
  %853 = vmatprep.subr.mxu0 0.0
  %854 = vmatpush1.msra.mxu0 0.0
  %855 = vmatprep.subr.mxu0 0.0
  %856 = vmatpush1.msra.mxu0 0.0
  %857 = vmatprep.subr.mxu0 0.0
  %858 = vmatpush1.msra.mxu0 0.0
  %859 = vmatprep.subr.mxu0 0.0
  %860 = vmatpush1.msra.mxu0 0.0
  %861 = vmatprep.subr.mxu0 0.0
  %862 = vmatpush1.msra.mxu0 0.0
  %863 = vmatprep.subr.mxu0 0.0
  %864 = vmatpush1.msra.mxu0 0.0
  %865 = vmatprep.subr.mxu0 0.0
  %866 = vmatpush1.msra.mxu0 0.0
  %867 = vmatprep.subr.mxu0 0.0
  %868 = vmatpush1.msra.mxu0 0.0
  %869 = vmatprep.subr.mxu0 0.0
  %870 = vmatpush1.msra.mxu0 0.0
  %871 = vmatprep.subr.mxu0 0.0
  %872 = vmatpush1.msra.mxu0 0.0
  %873 = vmatprep.mubr.f32.mxu0 0.0
  %874 = vmatmul.mubr.f32.gmra.mrb[0].mxu0 %v803
  %v875 = vpop.f32.mrb[0].mxu0
  %v876 = vadd.f32 0.0, %v875
  %v877 = vpop.f32.mrb[0].mxu0
  %v878 = vadd.f32 0.0, %v877
  %879 = vdwg.mxu0
  %880 = vmatprep.subr.mxu0 %v390
  %881 = vmatpush1.msra.mxu0 %v389
  %882 = vmatprep.subr.mxu0 %v394
  %883 = vmatpush1.msra.mxu0 %v393
  %884 = vmatprep.subr.mxu0 %v398
  %885 = vmatpush1.msra.mxu0 %v397
  %886 = vmatprep.subr.mxu0 %v402
  %887 = vmatpush1.msra.mxu0 %v401
  %888 = vmatprep.subr.mxu0 %v406
  %889 = vmatpush1.msra.mxu0 %v405
  %890 = vmatprep.subr.mxu0 %v410
  %891 = vmatpush1.msra.mxu0 %v409
  %892 = vmatprep.subr.mxu0 %v414
  %893 = vmatpush1.msra.mxu0 %v413
  %894 = vmatprep.subr.mxu0 %v418
  %895 = vmatpush1.msra.mxu0 %v417
  %896 = vmatprep.subr.mxu0 %v422
  %897 = vmatpush1.msra.mxu0 %v421
  %898 = vmatprep.subr.mxu0 %v426
  %899 = vmatpush1.msra.mxu0 %v425
  %900 = vmatprep.subr.mxu0 %v430
  %901 = vmatpush1.msra.mxu0 %v429
  %902 = vmatprep.subr.mxu0 %v434
  %903 = vmatpush1.msra.mxu0 %v433
  %904 = vmatprep.subr.mxu0 %v438
  %905 = vmatpush1.msra.mxu0 %v437
  %906 = vmatprep.subr.mxu0 %v442
  %907 = vmatpush1.msra.mxu0 %v441
  %908 = vmatprep.subr.mxu0 %v446
  %909 = vmatpush1.msra.mxu0 %v445
  %910 = vmatprep.subr.mxu0 %v450
  %911 = vmatpush1.msra.mxu0 %v449
  %912 = vmatprep.subr.mxu0 0.0
  %913 = vmatpush1.msra.mxu0 0.0
  %914 = vmatprep.subr.mxu0 0.0
  %915 = vmatpush1.msra.mxu0 0.0
  %916 = vmatprep.subr.mxu0 0.0
  %917 = vmatpush1.msra.mxu0 0.0
  %918 = vmatprep.subr.mxu0 0.0
  %919 = vmatpush1.msra.mxu0 0.0
  %920 = vmatprep.subr.mxu0 0.0
  %921 = vmatpush1.msra.mxu0 0.0
  %922 = vmatprep.subr.mxu0 0.0
  %923 = vmatpush1.msra.mxu0 0.0
  %924 = vmatprep.subr.mxu0 0.0
  %925 = vmatpush1.msra.mxu0 0.0
  %926 = vmatprep.subr.mxu0 0.0
  %927 = vmatpush1.msra.mxu0 0.0
  %928 = vmatprep.subr.mxu0 0.0
  %929 = vmatpush1.msra.mxu0 0.0
  %930 = vmatprep.subr.mxu0 0.0
  %931 = vmatpush1.msra.mxu0 0.0
  %932 = vmatprep.subr.mxu0 0.0
  %933 = vmatpush1.msra.mxu0 0.0
  %934 = vmatprep.subr.mxu0 0.0
  %935 = vmatpush1.msra.mxu0 0.0
  %936 = vmatprep.subr.mxu0 0.0
  %937 = vmatpush1.msra.mxu0 0.0
  %938 = vmatprep.subr.mxu0 0.0
  %939 = vmatpush1.msra.mxu0 0.0
  %940 = vmatprep.subr.mxu0 0.0
  %941 = vmatpush1.msra.mxu0 0.0
  %942 = vmatprep.subr.mxu0 0.0
  %943 = vmatpush1.msra.mxu0 0.0
  %944 = vmatprep.mubr.f32.mxu0 0.0
  %945 = vmatmul.mubr.f32.gmra.mrb[0].mxu0 %v803
  %v946 = vpop.f32.mrb[0].mxu0
  %v947 = vadd.f32 0.0, %v946
  %v948 = vpop.f32.mrb[0].mxu0
  %v949 = vadd.f32 0.0, %v948
  %950 = vdwg.mxu0
  %v951 = vadd.f32 %v805, %v876
  %v952 = vadd.f32 %v806, %v878
  %v953 = vadd.f32 %v807, %v947
  %v954 = vadd.f32 %v808, %v949
  %v955 = vadd.f32 %v951, %v364
  %v956 = vadd.f32 %v952, %v368
  %v957 = vadd.f32 %v953, %v372
  %v958 = vadd.f32 %v954, %v376
  %v959 = vxor.u32 %v955, 2147483648
  %v960 = vmul.f32 %v959, 1.442695
  %v961 = vpow.pop %v960
  %v962 = vadd.f32 %v961, 1.0
  %v963 = vrcp.pop %v962
  %v964 = vmul.f32 1.0, %v963
  %v965 = vxor.u32 %v956, 2147483648
  %v966 = vmul.f32 %v965, 1.442695
  %v967 = vpow.pop %v966
  %v968 = vadd.f32 %v967, 1.0
  %v969 = vrcp.pop %v968
  %v970 = vmul.f32 1.0, %v969
  %v971 = vtanh.pop %v957
  %v972 = vxor.u32 %v958, 2147483648
  %v973 = vmul.f32 %v972, 1.442695
  %v974 = vpow.pop %v973
  %v975 = vadd.f32 %v974, 1.0
  %v976 = vrcp.pop %v975
  %v977 = vmul.f32 1.0, %v976
  %v978 = vmul.f32 %v970, %v801
  %v979 = vmul.f32 %v964, %v971
  %v980 = vadd.f32 %v978, %v979
  %v981 = vtanh.pop %v980
  %v982 = vmul.f32 %v977, %v981
  %s983 = scalar_lea.vmem [#allocation4], 96
  %v984 = vld [vmem:[%s983] sm:$0xff]
  %v985 = vld [vmem:[%s983 + $0x8] sm:$0xff]
  %v986 = vld [vmem:[%s983 + $0x10] sm:$0xff]
  %v987 = vld [vmem:[%s983 + $0x18] sm:$0xff]
  %988 = vmatprep.subr.mxu0 %v388
  %989 = vmatpush1.msra.mxu0 %v387
  %990 = vmatprep.subr.mxu0 %v392
  %991 = vmatpush1.msra.mxu0 %v391
  %992 = vmatprep.subr.mxu0 %v396
  %993 = vmatpush1.msra.mxu0 %v395
  %994 = vmatprep.subr.mxu0 %v400
  %995 = vmatpush1.msra.mxu0 %v399
  %996 = vmatprep.subr.mxu0 %v404
  %997 = vmatpush1.msra.mxu0 %v403
  %998 = vmatprep.subr.mxu0 %v408
  %999 = vmatpush1.msra.mxu0 %v407
  %1000 = vmatprep.subr.mxu0 %v412
  %1001 = vmatpush1.msra.mxu0 %v411
  %1002 = vmatprep.subr.mxu0 %v416
  %1003 = vmatpush1.msra.mxu0 %v415
  %1004 = vmatprep.subr.mxu0 %v420
  %1005 = vmatpush1.msra.mxu0 %v419
  %1006 = vmatprep.subr.mxu0 %v424
  %1007 = vmatpush1.msra.mxu0 %v423
  %1008 = vmatprep.subr.mxu0 %v428
  %1009 = vmatpush1.msra.mxu0 %v427
  %1010 = vmatprep.subr.mxu0 %v432
  %1011 = vmatpush1.msra.mxu0 %v431
  %1012 = vmatprep.subr.mxu0 %v436
  %1013 = vmatpush1.msra.mxu0 %v435
  %1014 = vmatprep.subr.mxu0 %v440
  %1015 = vmatpush1.msra.mxu0 %v439
  %1016 = vmatprep.subr.mxu0 %v444
  %1017 = vmatpush1.msra.mxu0 %v443
  %1018 = vmatprep.subr.mxu0 %v448
  %1019 = vmatpush1.msra.mxu0 %v447
  %1020 = vmatprep.subr.mxu0 0.0
  %1021 = vmatpush1.msra.mxu0 0.0
  %1022 = vmatprep.subr.mxu0 0.0
  %1023 = vmatpush1.msra.mxu0 0.0
  %1024 = vmatprep.subr.mxu0 0.0
  %1025 = vmatpush1.msra.mxu0 0.0
  %1026 = vmatprep.subr.mxu0 0.0
  %1027 = vmatpush1.msra.mxu0 0.0
  %1028 = vmatprep.subr.mxu0 0.0
  %1029 = vmatpush1.msra.mxu0 0.0
  %1030 = vmatprep.subr.mxu0 0.0
  %1031 = vmatpush1.msra.mxu0 0.0
  %1032 = vmatprep.subr.mxu0 0.0
  %1033 = vmatpush1.msra.mxu0 0.0
  %1034 = vmatprep.subr.mxu0 0.0
  %1035 = vmatpush1.msra.mxu0 0.0
  %1036 = vmatprep.subr.mxu0 0.0
  %1037 = vmatpush1.msra.mxu0 0.0
  %1038 = vmatprep.subr.mxu0 0.0
  %1039 = vmatpush1.msra.mxu0 0.0
  %1040 = vmatprep.subr.mxu0 0.0
  %1041 = vmatpush1.msra.mxu0 0.0
  %1042 = vmatprep.subr.mxu0 0.0
  %1043 = vmatpush1.msra.mxu0 0.0
  %1044 = vmatprep.subr.mxu0 0.0
  %1045 = vmatpush1.msra.mxu0 0.0
  %1046 = vmatprep.subr.mxu0 0.0
  %1047 = vmatpush1.msra.mxu0 0.0
  %1048 = vmatprep.subr.mxu0 0.0
  %1049 = vmatpush1.msra.mxu0 0.0
  %1050 = vmatprep.subr.mxu0 0.0
  %1051 = vmatpush1.msra.mxu0 0.0
  %1052 = vmatprep.mubr.f32.mxu0 0.0
  %1053 = vmatmul.mubr.f32.gmra.mrb[0].mxu0 %v982
  %v1054 = vpop.f32.mrb[0].mxu0
  %v1055 = vadd.f32 0.0, %v1054
  %v1056 = vpop.f32.mrb[0].mxu0
  %v1057 = vadd.f32 0.0, %v1056
  %1058 = vdwg.mxu0
  %1059 = vmatprep.subr.mxu0 %v390
  %1060 = vmatpush1.msra.mxu0 %v389
  %1061 = vmatprep.subr.mxu0 %v394
  %1062 = vmatpush1.msra.mxu0 %v393
  %1063 = vmatprep.subr.mxu0 %v398
  %1064 = vmatpush1.msra.mxu0 %v397
  %1065 = vmatprep.subr.mxu0 %v402
  %1066 = vmatpush1.msra.mxu0 %v401
  %1067 = vmatprep.subr.mxu0 %v406
  %1068 = vmatpush1.msra.mxu0 %v405
  %1069 = vmatprep.subr.mxu0 %v410
  %1070 = vmatpush1.msra.mxu0 %v409
  %1071 = vmatprep.subr.mxu0 %v414
  %1072 = vmatpush1.msra.mxu0 %v413
  %1073 = vmatprep.subr.mxu0 %v418
  %1074 = vmatpush1.msra.mxu0 %v417
  %1075 = vmatprep.subr.mxu0 %v422
  %1076 = vmatpush1.msra.mxu0 %v421
  %1077 = vmatprep.subr.mxu0 %v426
  %1078 = vmatpush1.msra.mxu0 %v425
  %1079 = vmatprep.subr.mxu0 %v430
  %1080 = vmatpush1.msra.mxu0 %v429
  %1081 = vmatprep.subr.mxu0 %v434
  %1082 = vmatpush1.msra.mxu0 %v433
  %1083 = vmatprep.subr.mxu0 %v438
  %1084 = vmatpush1.msra.mxu0 %v437
  %1085 = vmatprep.subr.mxu0 %v442
  %1086 = vmatpush1.msra.mxu0 %v441
  %1087 = vmatprep.subr.mxu0 %v446
  %1088 = vmatpush1.msra.mxu0 %v445
  %1089 = vmatprep.subr.mxu0 %v450
  %1090 = vmatpush1.msra.mxu0 %v449
  %1091 = vmatprep.subr.mxu0 0.0
  %1092 = vmatpush1.msra.mxu0 0.0
  %1093 = vmatprep.subr.mxu0 0.0
  %1094 = vmatpush1.msra.mxu0 0.0
  %1095 = vmatprep.subr.mxu0 0.0
  %1096 = vmatpush1.msra.mxu0 0.0
  %1097 = vmatprep.subr.mxu0 0.0
  %1098 = vmatpush1.msra.mxu0 0.0
  %1099 = vmatprep.subr.mxu0 0.0
  %1100 = vmatpush1.msra.mxu0 0.0
  %1101 = vmatprep.subr.mxu0 0.0
  %1102 = vmatpush1.msra.mxu0 0.0
  %1103 = vmatprep.subr.mxu0 0.0
  %1104 = vmatpush1.msra.mxu0 0.0
  %1105 = vmatprep.subr.mxu0 0.0
  %1106 = vmatpush1.msra.mxu0 0.0
  %1107 = vmatprep.subr.mxu0 0.0
  %1108 = vmatpush1.msra.mxu0 0.0
  %1109 = vmatprep.subr.mxu0 0.0
  %1110 = vmatpush1.msra.mxu0 0.0
  %1111 = vmatprep.subr.mxu0 0.0
  %1112 = vmatpush1.msra.mxu0 0.0
  %1113 = vmatprep.subr.mxu0 0.0
  %1114 = vmatpush1.msra.mxu0 0.0
  %1115 = vmatprep.subr.mxu0 0.0
  %1116 = vmatpush1.msra.mxu0 0.0
  %1117 = vmatprep.subr.mxu0 0.0
  %1118 = vmatpush1.msra.mxu0 0.0
  %1119 = vmatprep.subr.mxu0 0.0
  %1120 = vmatpush1.msra.mxu0 0.0
  %1121 = vmatprep.subr.mxu0 0.0
  %1122 = vmatpush1.msra.mxu0 0.0
  %1123 = vmatprep.mubr.f32.mxu0 0.0
  %1124 = vmatmul.mubr.f32.gmra.mrb[0].mxu0 %v982
  %v1125 = vpop.f32.mrb[0].mxu0
  %v1126 = vadd.f32 0.0, %v1125
  %v1127 = vpop.f32.mrb[0].mxu0
  %v1128 = vadd.f32 0.0, %v1127
  %1129 = vdwg.mxu0
  %v1130 = vadd.f32 %v984, %v1055
  %v1131 = vadd.f32 %v985, %v1057
  %v1132 = vadd.f32 %v986, %v1126
  %v1133 = vadd.f32 %v987, %v1128
  %v1134 = vadd.f32 %v1130, %v364
  %v1135 = vadd.f32 %v1131, %v368
  %v1136 = vadd.f32 %v1132, %v372
  %v1137 = vadd.f32 %v1133, %v376
  %v1138 = vxor.u32 %v1134, 2147483648
  %v1139 = vmul.f32 %v1138, 1.442695
  %v1140 = vpow.pop %v1139
  %v1141 = vadd.f32 %v1140, 1.0
  %v1142 = vrcp.pop %v1141
  %v1143 = vmul.f32 1.0, %v1142
  %v1144 = vxor.u32 %v1135, 2147483648
  %v1145 = vmul.f32 %v1144, 1.442695
  %v1146 = vpow.pop %v1145
  %v1147 = vadd.f32 %v1146, 1.0
  %v1148 = vrcp.pop %v1147
  %v1149 = vmul.f32 1.0, %v1148
  %v1150 = vtanh.pop %v1136
  %v1151 = vxor.u32 %v1137, 2147483648
  %v1152 = vmul.f32 %v1151, 1.442695
  %v1153 = vpow.pop %v1152
  %v1154 = vadd.f32 %v1153, 1.0
  %v1155 = vrcp.pop %v1154
  %v1156 = vmul.f32 1.0, %v1155
  %v1157 = vmul.f32 %v1149, %v980
  %v1158 = vmul.f32 %v1143, %v1150
  %v1159 = vadd.f32 %v1157, %v1158
  %v1160 = vtanh.pop %v1159
  %v1161 = vmul.f32 %v1156, %v1160
  %s1162 = scalar_lea.vmem [#allocation4], 128
  %v1163 = vld [vmem:[%s1162] sm:$0xff]
  %v1164 = vld [vmem:[%s1162 + $0x8] sm:$0xff]
  %v1165 = vld [vmem:[%s1162 + $0x10] sm:$0xff]
  %v1166 = vld [vmem:[%s1162 + $0x18] sm:$0xff]
  %1167 = vmatprep.subr.mxu0 %v388
  %1168 = vmatpush1.msra.mxu0 %v387
  %1169 = vmatprep.subr.mxu0 %v392
  %1170 = vmatpush1.msra.mxu0 %v391
  %1171 = vmatprep.subr.mxu0 %v396
  %1172 = vmatpush1.msra.mxu0 %v395
  %1173 = vmatprep.subr.mxu0 %v400
  %1174 = vmatpush1.msra.mxu0 %v399
  %1175 = vmatprep.subr.mxu0 %v404
  %1176 = vmatpush1.msra.mxu0 %v403
  %1177 = vmatprep.subr.mxu0 %v408
  %1178 = vmatpush1.msra.mxu0 %v407
  %1179 = vmatprep.subr.mxu0 %v412
  %1180 = vmatpush1.msra.mxu0 %v411
  %1181 = vmatprep.subr.mxu0 %v416
  %1182 = vmatpush1.msra.mxu0 %v415
  %1183 = vmatprep.subr.mxu0 %v420
  %1184 = vmatpush1.msra.mxu0 %v419
  %1185 = vmatprep.subr.mxu0 %v424
  %1186 = vmatpush1.msra.mxu0 %v423
  %1187 = vmatprep.subr.mxu0 %v428
  %1188 = vmatpush1.msra.mxu0 %v427
  %1189 = vmatprep.subr.mxu0 %v432
  %1190 = vmatpush1.msra.mxu0 %v431
  %1191 = vmatprep.subr.mxu0 %v436
  %1192 = vmatpush1.msra.mxu0 %v435
  %1193 = vmatprep.subr.mxu0 %v440
  %1194 = vmatpush1.msra.mxu0 %v439
  %1195 = vmatprep.subr.mxu0 %v444
  %1196 = vmatpush1.msra.mxu0 %v443
  %1197 = vmatprep.subr.mxu0 %v448
  %1198 = vmatpush1.msra.mxu0 %v447
  %1199 = vmatprep.subr.mxu0 0.0
  %1200 = vmatpush1.msra.mxu0 0.0
  %1201 = vmatprep.subr.mxu0 0.0
  %1202 = vmatpush1.msra.mxu0 0.0
  %1203 = vmatprep.subr.mxu0 0.0
  %1204 = vmatpush1.msra.mxu0 0.0
  %1205 = vmatprep.subr.mxu0 0.0
  %1206 = vmatpush1.msra.mxu0 0.0
  %1207 = vmatprep.subr.mxu0 0.0
  %1208 = vmatpush1.msra.mxu0 0.0
  %1209 = vmatprep.subr.mxu0 0.0
  %1210 = vmatpush1.msra.mxu0 0.0
  %1211 = vmatprep.subr.mxu0 0.0
  %1212 = vmatpush1.msra.mxu0 0.0
  %1213 = vmatprep.subr.mxu0 0.0
  %1214 = vmatpush1.msra.mxu0 0.0
  %1215 = vmatprep.subr.mxu0 0.0
  %1216 = vmatpush1.msra.mxu0 0.0
  %1217 = vmatprep.subr.mxu0 0.0
  %1218 = vmatpush1.msra.mxu0 0.0
  %1219 = vmatprep.subr.mxu0 0.0
  %1220 = vmatpush1.msra.mxu0 0.0
  %1221 = vmatprep.subr.mxu0 0.0
  %1222 = vmatpush1.msra.mxu0 0.0
  %1223 = vmatprep.subr.mxu0 0.0
  %1224 = vmatpush1.msra.mxu0 0.0
  %1225 = vmatprep.subr.mxu0 0.0
  %1226 = vmatpush1.msra.mxu0 0.0
  %1227 = vmatprep.subr.mxu0 0.0
  %1228 = vmatpush1.msra.mxu0 0.0
  %1229 = vmatprep.subr.mxu0 0.0
  %1230 = vmatpush1.msra.mxu0 0.0
  %1231 = vmatprep.mubr.f32.mxu0 0.0
  %1232 = vmatmul.mubr.f32.gmra.mrb[0].mxu0 %v1161
  %v1233 = vpop.f32.mrb[0].mxu0
  %v1234 = vadd.f32 0.0, %v1233
  %v1235 = vpop.f32.mrb[0].mxu0
  %v1236 = vadd.f32 0.0, %v1235
  %1237 = vdwg.mxu0
  %1238 = vmatprep.subr.mxu0 %v390
  %1239 = vmatpush1.msra.mxu0 %v389
  %1240 = vmatprep.subr.mxu0 %v394
  %1241 = vmatpush1.msra.mxu0 %v393
  %1242 = vmatprep.subr.mxu0 %v398
  %1243 = vmatpush1.msra.mxu0 %v397
  %1244 = vmatprep.subr.mxu0 %v402
  %1245 = vmatpush1.msra.mxu0 %v401
  %1246 = vmatprep.subr.mxu0 %v406
  %1247 = vmatpush1.msra.mxu0 %v405
  %1248 = vmatprep.subr.mxu0 %v410
  %1249 = vmatpush1.msra.mxu0 %v409
  %1250 = vmatprep.subr.mxu0 %v414
  %1251 = vmatpush1.msra.mxu0 %v413
  %1252 = vmatprep.subr.mxu0 %v418
  %1253 = vmatpush1.msra.mxu0 %v417
  %1254 = vmatprep.subr.mxu0 %v422
  %1255 = vmatpush1.msra.mxu0 %v421
  %1256 = vmatprep.subr.mxu0 %v426
  %1257 = vmatpush1.msra.mxu0 %v425
  %1258 = vmatprep.subr.mxu0 %v430
  %1259 = vmatpush1.msra.mxu0 %v429
  %1260 = vmatprep.subr.mxu0 %v434
  %1261 = vmatpush1.msra.mxu0 %v433
  %1262 = vmatprep.subr.mxu0 %v438
  %1263 = vmatpush1.msra.mxu0 %v437
  %1264 = vmatprep.subr.mxu0 %v442
  %1265 = vmatpush1.msra.mxu0 %v441
  %1266 = vmatprep.subr.mxu0 %v446
  %1267 = vmatpush1.msra.mxu0 %v445
  %1268 = vmatprep.subr.mxu0 %v450
  %1269 = vmatpush1.msra.mxu0 %v449
  %1270 = vmatprep.subr.mxu0 0.0
  %1271 = vmatpush1.msra.mxu0 0.0
  %1272 = vmatprep.subr.mxu0 0.0
  %1273 = vmatpush1.msra.mxu0 0.0
  %1274 = vmatprep.subr.mxu0 0.0
  %1275 = vmatpush1.msra.mxu0 0.0
  %1276 = vmatprep.subr.mxu0 0.0
  %1277 = vmatpush1.msra.mxu0 0.0
  %1278 = vmatprep.subr.mxu0 0.0
  %1279 = vmatpush1.msra.mxu0 0.0
  %1280 = vmatprep.subr.mxu0 0.0
  %1281 = vmatpush1.msra.mxu0 0.0
  %1282 = vmatprep.subr.mxu0 0.0
  %1283 = vmatpush1.msra.mxu0 0.0
  %1284 = vmatprep.subr.mxu0 0.0
  %1285 = vmatpush1.msra.mxu0 0.0
  %1286 = vmatprep.subr.mxu0 0.0
  %1287 = vmatpush1.msra.mxu0 0.0
  %1288 = vmatprep.subr.mxu0 0.0
  %1289 = vmatpush1.msra.mxu0 0.0
  %1290 = vmatprep.subr.mxu0 0.0
  %1291 = vmatpush1.msra.mxu0 0.0
  %1292 = vmatprep.subr.mxu0 0.0
  %1293 = vmatpush1.msra.mxu0 0.0
  %1294 = vmatprep.subr.mxu0 0.0
  %1295 = vmatpush1.msra.mxu0 0.0
  %1296 = vmatprep.subr.mxu0 0.0
  %1297 = vmatpush1.msra.mxu0 0.0
  %1298 = vmatprep.subr.mxu0 0.0
  %1299 = vmatpush1.msra.mxu0 0.0
  %1300 = vmatprep.subr.mxu0 0.0
  %1301 = vmatpush1.msra.mxu0 0.0
  %1302 = vmatprep.mubr.f32.mxu0 0.0
  %1303 = vmatmul.mubr.f32.gmra.mrb[0].mxu0 %v1161
  %v1304 = vpop.f32.mrb[0].mxu0
  %v1305 = vadd.f32 0.0, %v1304
  %v1306 = vpop.f32.mrb[0].mxu0
  %v1307 = vadd.f32 0.0, %v1306
  %1308 = vdwg.mxu0
  %v1309 = vadd.f32 %v1163, %v1234
  %v1310 = vadd.f32 %v1164, %v1236
  %v1311 = vadd.f32 %v1165, %v1305
  %v1312 = vadd.f32 %v1166, %v1307
  %v1313 = vadd.f32 %v1309, %v364
  %v1314 = vadd.f32 %v1310, %v368
  %v1315 = vadd.f32 %v1311, %v372
  %v1316 = vadd.f32 %v1312, %v376
  %v1317 = vxor.u32 %v1313, 2147483648
  %v1318 = vmul.f32 %v1317, 1.442695
  %v1319 = vpow.pop %v1318
  %v1320 = vadd.f32 %v1319, 1.0
  %v1321 = vrcp.pop %v1320
  %v1322 = vmul.f32 1.0, %v1321
  %v1323 = vxor.u32 %v1314, 2147483648
  %v1324 = vmul.f32 %v1323, 1.442695
  %v1325 = vpow.pop %v1324
  %v1326 = vadd.f32 %v1325, 1.0
  %v1327 = vrcp.pop %v1326
  %v1328 = vmul.f32 1.0, %v1327
  %v1329 = vtanh.pop %v1315
  %v1330 = vxor.u32 %v1316, 2147483648
  %v1331 = vmul.f32 %v1330, 1.442695
  %v1332 = vpow.pop %v1331
  %v1333 = vadd.f32 %v1332, 1.0
  %v1334 = vrcp.pop %v1333
  %v1335 = vmul.f32 1.0, %v1334
  %v1336 = vmul.f32 %v1328, %v1159
  %v1337 = vmul.f32 %v1322, %v1329
  %v1338 = vadd.f32 %v1336, %v1337
  %v1339 = vtanh.pop %v1338
  %v1340 = vmul.f32 %v1335, %v1339
  %s1341 = scalar_lea.vmem [#allocation4], 160
  %v1342 = vld [vmem:[%s1341] sm:$0xff]
  %v1343 = vld [vmem:[%s1341 + $0x8] sm:$0xff]
  %v1344 = vld [vmem:[%s1341 + $0x10] sm:$0xff]
  %v1345 = vld [vmem:[%s1341 + $0x18] sm:$0xff]
  %1346 = vmatprep.subr.mxu0 %v388
  %1347 = vmatpush1.msra.mxu0 %v387
  %1348 = vmatprep.subr.mxu0 %v392
  %1349 = vmatpush1.msra.mxu0 %v391
  %1350 = vmatprep.subr.mxu0 %v396
  %1351 = vmatpush1.msra.mxu0 %v395
  %1352 = vmatprep.subr.mxu0 %v400
  %1353 = vmatpush1.msra.mxu0 %v399
  %1354 = vmatprep.subr.mxu0 %v404
  %1355 = vmatpush1.msra.mxu0 %v403
  %1356 = vmatprep.subr.mxu0 %v408
  %1357 = vmatpush1.msra.mxu0 %v407
  %1358 = vmatprep.subr.mxu0 %v412
  %1359 = vmatpush1.msra.mxu0 %v411
  %1360 = vmatprep.subr.mxu0 %v416
  %1361 = vmatpush1.msra.mxu0 %v415
  %1362 = vmatprep.subr.mxu0 %v420
  %1363 = vmatpush1.msra.mxu0 %v419
  %1364 = vmatprep.subr.mxu0 %v424
  %1365 = vmatpush1.msra.mxu0 %v423
  %1366 = vmatprep.subr.mxu0 %v428
  %1367 = vmatpush1.msra.mxu0 %v427
  %1368 = vmatprep.subr.mxu0 %v432
  %1369 = vmatpush1.msra.mxu0 %v431
  %1370 = vmatprep.subr.mxu0 %v436
  %1371 = vmatpush1.msra.mxu0 %v435
  %1372 = vmatprep.subr.mxu0 %v440
  %1373 = vmatpush1.msra.mxu0 %v439
  %1374 = vmatprep.subr.mxu0 %v444
  %1375 = vmatpush1.msra.mxu0 %v443
  %1376 = vmatprep.subr.mxu0 %v448
  %1377 = vmatpush1.msra.mxu0 %v447
  %1378 = vmatprep.subr.mxu0 0.0
  %1379 = vmatpush1.msra.mxu0 0.0
  %1380 = vmatprep.subr.mxu0 0.0
  %1381 = vmatpush1.msra.mxu0 0.0
  %1382 = vmatprep.subr.mxu0 0.0
  %1383 = vmatpush1.msra.mxu0 0.0
  %1384 = vmatprep.subr.mxu0 0.0
  %1385 = vmatpush1.msra.mxu0 0.0
  %1386 = vmatprep.subr.mxu0 0.0
  %1387 = vmatpush1.msra.mxu0 0.0
  %1388 = vmatprep.subr.mxu0 0.0
  %1389 = vmatpush1.msra.mxu0 0.0
  %1390 = vmatprep.subr.mxu0 0.0
  %1391 = vmatpush1.msra.mxu0 0.0
  %1392 = vmatprep.subr.mxu0 0.0
  %1393 = vmatpush1.msra.mxu0 0.0
  %1394 = vmatprep.subr.mxu0 0.0
  %1395 = vmatpush1.msra.mxu0 0.0
  %1396 = vmatprep.subr.mxu0 0.0
  %1397 = vmatpush1.msra.mxu0 0.0
  %1398 = vmatprep.subr.mxu0 0.0
  %1399 = vmatpush1.msra.mxu0 0.0
  %1400 = vmatprep.subr.mxu0 0.0
  %1401 = vmatpush1.msra.mxu0 0.0
  %1402 = vmatprep.subr.mxu0 0.0
  %1403 = vmatpush1.msra.mxu0 0.0
  %1404 = vmatprep.subr.mxu0 0.0
  %1405 = vmatpush1.msra.mxu0 0.0
  %1406 = vmatprep.subr.mxu0 0.0
  %1407 = vmatpush1.msra.mxu0 0.0
  %1408 = vmatprep.subr.mxu0 0.0
  %1409 = vmatpush1.msra.mxu0 0.0
  %1410 = vmatprep.mubr.f32.mxu0 0.0
  %1411 = vmatmul.mubr.f32.gmra.mrb[0].mxu0 %v1340
  %v1412 = vpop.f32.mrb[0].mxu0
  %v1413 = vadd.f32 0.0, %v1412
  %v1414 = vpop.f32.mrb[0].mxu0
  %v1415 = vadd.f32 0.0, %v1414
  %1416 = vdwg.mxu0
  %1417 = vmatprep.subr.mxu0 %v390
  %1418 = vmatpush1.msra.mxu0 %v389
  %1419 = vmatprep.subr.mxu0 %v394
  %1420 = vmatpush1.msra.mxu0 %v393
  %1421 = vmatprep.subr.mxu0 %v398
  %1422 = vmatpush1.msra.mxu0 %v397
  %1423 = vmatprep.subr.mxu0 %v402
  %1424 = vmatpush1.msra.mxu0 %v401
  %1425 = vmatprep.subr.mxu0 %v406
  %1426 = vmatpush1.msra.mxu0 %v405
  %1427 = vmatprep.subr.mxu0 %v410
  %1428 = vmatpush1.msra.mxu0 %v409
  %1429 = vmatprep.subr.mxu0 %v414
  %1430 = vmatpush1.msra.mxu0 %v413
  %1431 = vmatprep.subr.mxu0 %v418
  %1432 = vmatpush1.msra.mxu0 %v417
  %1433 = vmatprep.subr.mxu0 %v422
  %1434 = vmatpush1.msra.mxu0 %v421
  %1435 = vmatprep.subr.mxu0 %v426
  %1436 = vmatpush1.msra.mxu0 %v425
  %1437 = vmatprep.subr.mxu0 %v430
  %1438 = vmatpush1.msra.mxu0 %v429
  %1439 = vmatprep.subr.mxu0 %v434
  %1440 = vmatpush1.msra.mxu0 %v433
  %1441 = vmatprep.subr.mxu0 %v438
  %1442 = vmatpush1.msra.mxu0 %v437
  %1443 = vmatprep.subr.mxu0 %v442
  %1444 = vmatpush1.msra.mxu0 %v441
  %1445 = vmatprep.subr.mxu0 %v446
  %1446 = vmatpush1.msra.mxu0 %v445
  %1447 = vmatprep.subr.mxu0 %v450
  %1448 = vmatpush1.msra.mxu0 %v449
  %1449 = vmatprep.subr.mxu0 0.0
  %1450 = vmatpush1.msra.mxu0 0.0
  %1451 = vmatprep.subr.mxu0 0.0
  %1452 = vmatpush1.msra.mxu0 0.0
  %1453 = vmatprep.subr.mxu0 0.0
  %1454 = vmatpush1.msra.mxu0 0.0
  %1455 = vmatprep.subr.mxu0 0.0
  %1456 = vmatpush1.msra.mxu0 0.0
  %1457 = vmatprep.subr.mxu0 0.0
  %1458 = vmatpush1.msra.mxu0 0.0
  %1459 = vmatprep.subr.mxu0 0.0
  %1460 = vmatpush1.msra.mxu0 0.0
  %1461 = vmatprep.subr.mxu0 0.0
  %1462 = vmatpush1.msra.mxu0 0.0
  %1463 = vmatprep.subr.mxu0 0.0
  %1464 = vmatpush1.msra.mxu0 0.0
  %1465 = vmatprep.subr.mxu0 0.0
  %1466 = vmatpush1.msra.mxu0 0.0
  %1467 = vmatprep.subr.mxu0 0.0
  %1468 = vmatpush1.msra.mxu0 0.0
  %1469 = vmatprep.subr.mxu0 0.0
  %1470 = vmatpush1.msra.mxu0 0.0
  %1471 = vmatprep.subr.mxu0 0.0
  %1472 = vmatpush1.msra.mxu0 0.0
  %1473 = vmatprep.subr.mxu0 0.0
  %1474 = vmatpush1.msra.mxu0 0.0
  %1475 = vmatprep.subr.mxu0 0.0
  %1476 = vmatpush1.msra.mxu0 0.0
  %1477 = vmatprep.subr.mxu0 0.0
  %1478 = vmatpush1.msra.mxu0 0.0
  %1479 = vmatprep.subr.mxu0 0.0
  %1480 = vmatpush1.msra.mxu0 0.0
  %1481 = vmatprep.mubr.f32.mxu0 0.0
  %1482 = vmatmul.mubr.f32.gmra.mrb[0].mxu0 %v1340
  %v1483 = vpop.f32.mrb[0].mxu0
  %v1484 = vadd.f32 0.0, %v1483
  %v1485 = vpop.f32.mrb[0].mxu0
  %v1486 = vadd.f32 0.0, %v1485
  %1487 = vdwg.mxu0
  %v1488 = vadd.f32 %v1342, %v1413
  %v1489 = vadd.f32 %v1343, %v1415
  %v1490 = vadd.f32 %v1344, %v1484
  %v1491 = vadd.f32 %v1345, %v1486
  %v1492 = vadd.f32 %v1488, %v364
  %v1493 = vadd.f32 %v1489, %v368
  %v1494 = vadd.f32 %v1490, %v372
  %v1495 = vadd.f32 %v1491, %v376
  %v1496 = vxor.u32 %v1492, 2147483648
  %v1497 = vmul.f32 %v1496, 1.442695
  %v1498 = vpow.pop %v1497
  %v1499 = vadd.f32 %v1498, 1.0
  %v1500 = vrcp.pop %v1499
  %v1501 = vmul.f32 1.0, %v1500
  %v1502 = vxor.u32 %v1493, 2147483648
  %v1503 = vmul.f32 %v1502, 1.442695
  %v1504 = vpow.pop %v1503
  %v1505 = vadd.f32 %v1504, 1.0
  %v1506 = vrcp.pop %v1505
  %v1507 = vmul.f32 1.0, %v1506
  %v1508 = vtanh.pop %v1494
  %v1509 = vxor.u32 %v1495, 2147483648
  %v1510 = vmul.f32 %v1509, 1.442695
  %v1511 = vpow.pop %v1510
  %v1512 = vadd.f32 %v1511, 1.0
  %v1513 = vrcp.pop %v1512
  %v1514 = vmul.f32 1.0, %v1513
  %v1515 = vmul.f32 %v1507, %v1338
  %v1516 = vmul.f32 %v1501, %v1508
  %v1517 = vadd.f32 %v1515, %v1516
  %v1518 = vtanh.pop %v1517
  %v1519 = vmul.f32 %v1514, %v1518
  %s1520 = scalar_lea.vmem [#allocation4], 192
  %v1521 = vld [vmem:[%s1520] sm:$0xff]
  %v1522 = vld [vmem:[%s1520 + $0x8] sm:$0xff]
  %v1523 = vld [vmem:[%s1520 + $0x10] sm:$0xff]
  %v1524 = vld [vmem:[%s1520 + $0x18] sm:$0xff]
  %1525 = vmatprep.subr.mxu0 %v388
  %1526 = vmatpush1.msra.mxu0 %v387
  %1527 = vmatprep.subr.mxu0 %v392
  %1528 = vmatpush1.msra.mxu0 %v391
  %1529 = vmatprep.subr.mxu0 %v396
  %1530 = vmatpush1.msra.mxu0 %v395
  %1531 = vmatprep.subr.mxu0 %v400
  %1532 = vmatpush1.msra.mxu0 %v399
  %1533 = vmatprep.subr.mxu0 %v404
  %1534 = vmatpush1.msra.mxu0 %v403
  %1535 = vmatprep.subr.mxu0 %v408
  %1536 = vmatpush1.msra.mxu0 %v407
  %1537 = vmatprep.subr.mxu0 %v412
  %1538 = vmatpush1.msra.mxu0 %v411
  %1539 = vmatprep.subr.mxu0 %v416
  %1540 = vmatpush1.msra.mxu0 %v415
  %1541 = vmatprep.subr.mxu0 %v420
  %1542 = vmatpush1.msra.mxu0 %v419
  %1543 = vmatprep.subr.mxu0 %v424
  %1544 = vmatpush1.msra.mxu0 %v423
  %1545 = vmatprep.subr.mxu0 %v428
  %1546 = vmatpush1.msra.mxu0 %v427
  %1547 = vmatprep.subr.mxu0 %v432
  %1548 = vmatpush1.msra.mxu0 %v431
  %1549 = vmatprep.subr.mxu0 %v436
  %1550 = vmatpush1.msra.mxu0 %v435
  %1551 = vmatprep.subr.mxu0 %v440
  %1552 = vmatpush1.msra.mxu0 %v439
  %1553 = vmatprep.subr.mxu0 %v444
  %1554 = vmatpush1.msra.mxu0 %v443
  %1555 = vmatprep.subr.mxu0 %v448
  %1556 = vmatpush1.msra.mxu0 %v447
  %1557 = vmatprep.subr.mxu0 0.0
  %1558 = vmatpush1.msra.mxu0 0.0
  %1559 = vmatprep.subr.mxu0 0.0
  %1560 = vmatpush1.msra.mxu0 0.0
  %1561 = vmatprep.subr.mxu0 0.0
  %1562 = vmatpush1.msra.mxu0 0.0
  %1563 = vmatprep.subr.mxu0 0.0
  %1564 = vmatpush1.msra.mxu0 0.0
  %1565 = vmatprep.subr.mxu0 0.0
  %1566 = vmatpush1.msra.mxu0 0.0
  %1567 = vmatprep.subr.mxu0 0.0
  %1568 = vmatpush1.msra.mxu0 0.0
  %1569 = vmatprep.subr.mxu0 0.0
  %1570 = vmatpush1.msra.mxu0 0.0
  %1571 = vmatprep.subr.mxu0 0.0
  %1572 = vmatpush1.msra.mxu0 0.0
  %1573 = vmatprep.subr.mxu0 0.0
  %1574 = vmatpush1.msra.mxu0 0.0
  %1575 = vmatprep.subr.mxu0 0.0
  %1576 = vmatpush1.msra.mxu0 0.0
  %1577 = vmatprep.subr.mxu0 0.0
  %1578 = vmatpush1.msra.mxu0 0.0
  %1579 = vmatprep.subr.mxu0 0.0
  %1580 = vmatpush1.msra.mxu0 0.0
  %1581 = vmatprep.subr.mxu0 0.0
  %1582 = vmatpush1.msra.mxu0 0.0
  %1583 = vmatprep.subr.mxu0 0.0
  %1584 = vmatpush1.msra.mxu0 0.0
  %1585 = vmatprep.subr.mxu0 0.0
  %1586 = vmatpush1.msra.mxu0 0.0
  %1587 = vmatprep.subr.mxu0 0.0
  %1588 = vmatpush1.msra.mxu0 0.0
  %1589 = vmatprep.mubr.f32.mxu0 0.0
  %1590 = vmatmul.mubr.f32.gmra.mrb[0].mxu0 %v1519
  %v1591 = vpop.f32.mrb[0].mxu0
  %v1592 = vadd.f32 0.0, %v1591
  %v1593 = vpop.f32.mrb[0].mxu0
  %v1594 = vadd.f32 0.0, %v1593
  %1595 = vdwg.mxu0
  %1596 = vmatprep.subr.mxu0 %v390
  %1597 = vmatpush1.msra.mxu0 %v389
  %1598 = vmatprep.subr.mxu0 %v394
  %1599 = vmatpush1.msra.mxu0 %v393
  %1600 = vmatprep.subr.mxu0 %v398
  %1601 = vmatpush1.msra.mxu0 %v397
  %1602 = vmatprep.subr.mxu0 %v402
  %1603 = vmatpush1.msra.mxu0 %v401
  %1604 = vmatprep.subr.mxu0 %v406
  %1605 = vmatpush1.msra.mxu0 %v405
  %1606 = vmatprep.subr.mxu0 %v410
  %1607 = vmatpush1.msra.mxu0 %v409
  %1608 = vmatprep.subr.mxu0 %v414
  %1609 = vmatpush1.msra.mxu0 %v413
  %1610 = vmatprep.subr.mxu0 %v418
  %1611 = vmatpush1.msra.mxu0 %v417
  %1612 = vmatprep.subr.mxu0 %v422
  %1613 = vmatpush1.msra.mxu0 %v421
  %1614 = vmatprep.subr.mxu0 %v426
  %1615 = vmatpush1.msra.mxu0 %v425
  %1616 = vmatprep.subr.mxu0 %v430
  %1617 = vmatpush1.msra.mxu0 %v429
  %1618 = vmatprep.subr.mxu0 %v434
  %1619 = vmatpush1.msra.mxu0 %v433
  %1620 = vmatprep.subr.mxu0 %v438
  %1621 = vmatpush1.msra.mxu0 %v437
  %1622 = vmatprep.subr.mxu0 %v442
  %1623 = vmatpush1.msra.mxu0 %v441
  %1624 = vmatprep.subr.mxu0 %v446
  %1625 = vmatpush1.msra.mxu0 %v445
  %1626 = vmatprep.subr.mxu0 %v450
  %1627 = vmatpush1.msra.mxu0 %v449
  %1628 = vmatprep.subr.mxu0 0.0
  %1629 = vmatpush1.msra.mxu0 0.0
  %1630 = vmatprep.subr.mxu0 0.0
  %1631 = vmatpush1.msra.mxu0 0.0
  %1632 = vmatprep.subr.mxu0 0.0
  %1633 = vmatpush1.msra.mxu0 0.0
  %1634 = vmatprep.subr.mxu0 0.0
  %1635 = vmatpush1.msra.mxu0 0.0
  %1636 = vmatprep.subr.mxu0 0.0
  %1637 = vmatpush1.msra.mxu0 0.0
  %1638 = vmatprep.subr.mxu0 0.0
  %1639 = vmatpush1.msra.mxu0 0.0
  %1640 = vmatprep.subr.mxu0 0.0
  %1641 = vmatpush1.msra.mxu0 0.0
  %1642 = vmatprep.subr.mxu0 0.0
  %1643 = vmatpush1.msra.mxu0 0.0
  %1644 = vmatprep.subr.mxu0 0.0
  %1645 = vmatpush1.msra.mxu0 0.0
  %1646 = vmatprep.subr.mxu0 0.0
  %1647 = vmatpush1.msra.mxu0 0.0
  %1648 = vmatprep.subr.mxu0 0.0
  %1649 = vmatpush1.msra.mxu0 0.0
  %1650 = vmatprep.subr.mxu0 0.0
  %1651 = vmatpush1.msra.mxu0 0.0
  %1652 = vmatprep.subr.mxu0 0.0
  %1653 = vmatpush1.msra.mxu0 0.0
  %1654 = vmatprep.subr.mxu0 0.0
  %1655 = vmatpush1.msra.mxu0 0.0
  %1656 = vmatprep.subr.mxu0 0.0
  %1657 = vmatpush1.msra.mxu0 0.0
  %1658 = vmatprep.subr.mxu0 0.0
  %1659 = vmatpush1.msra.mxu0 0.0
  %1660 = vmatprep.mubr.f32.mxu0 0.0
  %1661 = vmatmul.mubr.f32.gmra.mrb[0].mxu0 %v1519
  %v1662 = vpop.f32.mrb[0].mxu0
  %v1663 = vadd.f32 0.0, %v1662
  %v1664 = vpop.f32.mrb[0].mxu0
  %v1665 = vadd.f32 0.0, %v1664
  %1666 = vdwg.mxu0
  %v1667 = vadd.f32 %v1521, %v1592
  %v1668 = vadd.f32 %v1522, %v1594
  %v1669 = vadd.f32 %v1523, %v1663
  %v1670 = vadd.f32 %v1524, %v1665
  %v1671 = vadd.f32 %v1667, %v364
  %v1672 = vadd.f32 %v1668, %v368
  %v1673 = vadd.f32 %v1669, %v372
  %v1674 = vadd.f32 %v1670, %v376
  %v1675 = vxor.u32 %v1671, 2147483648
  %v1676 = vmul.f32 %v1675, 1.442695
  %v1677 = vpow.pop %v1676
  %v1678 = vadd.f32 %v1677, 1.0
  %v1679 = vrcp.pop %v1678
  %v1680 = vmul.f32 1.0, %v1679
  %v1681 = vxor.u32 %v1672, 2147483648
  %v1682 = vmul.f32 %v1681, 1.442695
  %v1683 = vpow.pop %v1682
  %v1684 = vadd.f32 %v1683, 1.0
  %v1685 = vrcp.pop %v1684
  %v1686 = vmul.f32 1.0, %v1685
  %v1687 = vtanh.pop %v1673
  %v1688 = vxor.u32 %v1674, 2147483648
  %v1689 = vmul.f32 %v1688, 1.442695
  %v1690 = vpow.pop %v1689
  %v1691 = vadd.f32 %v1690, 1.0
  %v1692 = vrcp.pop %v1691
  %v1693 = vmul.f32 1.0, %v1692
  %v1694 = vmul.f32 %v1686, %v1517
  %v1695 = vmul.f32 %v1680, %v1687
  %v1696 = vadd.f32 %v1694, %v1695
  %v1697 = vtanh.pop %v1696
  %v1698 = vmul.f32 %v1693, %v1697
  %s1699 = scalar_lea.vmem [#allocation4], 224
  %v1700 = vld [vmem:[%s1699] sm:$0xff]
  %v1701 = vld [vmem:[%s1699 + $0x8] sm:$0xff]
  %v1702 = vld [vmem:[%s1699 + $0x10] sm:$0xff]
  %v1703 = vld [vmem:[%s1699 + $0x18] sm:$0xff]
  %1704 = vmatprep.subr.mxu0 %v388
  %1705 = vmatpush1.msra.mxu0 %v387
  %1706 = vmatprep.subr.mxu0 %v392
  %1707 = vmatpush1.msra.mxu0 %v391
  %1708 = vmatprep.subr.mxu0 %v396
  %1709 = vmatpush1.msra.mxu0 %v395
  %1710 = vmatprep.subr.mxu0 %v400
  %1711 = vmatpush1.msra.mxu0 %v399
  %1712 = vmatprep.subr.mxu0 %v404
  %1713 = vmatpush1.msra.mxu0 %v403
  %1714 = vmatprep.subr.mxu0 %v408
  %1715 = vmatpush1.msra.mxu0 %v407
  %1716 = vmatprep.subr.mxu0 %v412
  %1717 = vmatpush1.msra.mxu0 %v411
  %1718 = vmatprep.subr.mxu0 %v416
  %1719 = vmatpush1.msra.mxu0 %v415
  %1720 = vmatprep.subr.mxu0 %v420
  %1721 = vmatpush1.msra.mxu0 %v419
  %1722 = vmatprep.subr.mxu0 %v424
  %1723 = vmatpush1.msra.mxu0 %v423
  %1724 = vmatprep.subr.mxu0 %v428
  %1725 = vmatpush1.msra.mxu0 %v427
  %1726 = vmatprep.subr.mxu0 %v432
  %1727 = vmatpush1.msra.mxu0 %v431
  %1728 = vmatprep.subr.mxu0 %v436
  %1729 = vmatpush1.msra.mxu0 %v435
  %1730 = vmatprep.subr.mxu0 %v440
  %1731 = vmatpush1.msra.mxu0 %v439
  %1732 = vmatprep.subr.mxu0 %v444
  %1733 = vmatpush1.msra.mxu0 %v443
  %1734 = vmatprep.subr.mxu0 %v448
  %1735 = vmatpush1.msra.mxu0 %v447
  %1736 = vmatprep.subr.mxu0 0.0
  %1737 = vmatpush1.msra.mxu0 0.0
  %1738 = vmatprep.subr.mxu0 0.0
  %1739 = vmatpush1.msra.mxu0 0.0
  %1740 = vmatprep.subr.mxu0 0.0
  %1741 = vmatpush1.msra.mxu0 0.0
  %1742 = vmatprep.subr.mxu0 0.0
  %1743 = vmatpush1.msra.mxu0 0.0
  %1744 = vmatprep.subr.mxu0 0.0
  %1745 = vmatpush1.msra.mxu0 0.0
  %1746 = vmatprep.subr.mxu0 0.0
  %1747 = vmatpush1.msra.mxu0 0.0
  %1748 = vmatprep.subr.mxu0 0.0
  %1749 = vmatpush1.msra.mxu0 0.0
  %1750 = vmatprep.subr.mxu0 0.0
  %1751 = vmatpush1.msra.mxu0 0.0
  %1752 = vmatprep.subr.mxu0 0.0
  %1753 = vmatpush1.msra.mxu0 0.0
  %1754 = vmatprep.subr.mxu0 0.0
  %1755 = vmatpush1.msra.mxu0 0.0
  %1756 = vmatprep.subr.mxu0 0.0
  %1757 = vmatpush1.msra.mxu0 0.0
  %1758 = vmatprep.subr.mxu0 0.0
  %1759 = vmatpush1.msra.mxu0 0.0
  %1760 = vmatprep.subr.mxu0 0.0
  %1761 = vmatpush1.msra.mxu0 0.0
  %1762 = vmatprep.subr.mxu0 0.0
  %1763 = vmatpush1.msra.mxu0 0.0
  %1764 = vmatprep.subr.mxu0 0.0
  %1765 = vmatpush1.msra.mxu0 0.0
  %1766 = vmatprep.subr.mxu0 0.0
  %1767 = vmatpush1.msra.mxu0 0.0
  %1768 = vmatprep.mubr.f32.mxu0 0.0
  %1769 = vmatmul.mubr.f32.gmra.mrb[0].mxu0 %v1698
  %v1770 = vpop.f32.mrb[0].mxu0
  %v1771 = vadd.f32 0.0, %v1770
  %v1772 = vpop.f32.mrb[0].mxu0
  %v1773 = vadd.f32 0.0, %v1772
  %1774 = vdwg.mxu0
  %1775 = vmatprep.subr.mxu0 %v390
  %1776 = vmatpush1.msra.mxu0 %v389
  %1777 = vmatprep.subr.mxu0 %v394
  %1778 = vmatpush1.msra.mxu0 %v393
  %1779 = vmatprep.subr.mxu0 %v398
  %1780 = vmatpush1.msra.mxu0 %v397
  %1781 = vmatprep.subr.mxu0 %v402
  %1782 = vmatpush1.msra.mxu0 %v401
  %1783 = vmatprep.subr.mxu0 %v406
  %1784 = vmatpush1.msra.mxu0 %v405
  %1785 = vmatprep.subr.mxu0 %v410
  %1786 = vmatpush1.msra.mxu0 %v409
  %1787 = vmatprep.subr.mxu0 %v414
  %1788 = vmatpush1.msra.mxu0 %v413
  %1789 = vmatprep.subr.mxu0 %v418
  %1790 = vmatpush1.msra.mxu0 %v417
  %1791 = vmatprep.subr.mxu0 %v422
  %1792 = vmatpush1.msra.mxu0 %v421
  %1793 = vmatprep.subr.mxu0 %v426
  %1794 = vmatpush1.msra.mxu0 %v425
  %1795 = vmatprep.subr.mxu0 %v430
  %1796 = vmatpush1.msra.mxu0 %v429
  %1797 = vmatprep.subr.mxu0 %v434
  %1798 = vmatpush1.msra.mxu0 %v433
  %1799 = vmatprep.subr.mxu0 %v438
  %1800 = vmatpush1.msra.mxu0 %v437
  %1801 = vmatprep.subr.mxu0 %v442
  %1802 = vmatpush1.msra.mxu0 %v441
  %1803 = vmatprep.subr.mxu0 %v446
  %1804 = vmatpush1.msra.mxu0 %v445
  %1805 = vmatprep.subr.mxu0 %v450
  %1806 = vmatpush1.msra.mxu0 %v449
  %1807 = vmatprep.subr.mxu0 0.0
  %1808 = vmatpush1.msra.mxu0 0.0
  %1809 = vmatprep.subr.mxu0 0.0
  %1810 = vmatpush1.msra.mxu0 0.0
  %1811 = vmatprep.subr.mxu0 0.0
  %1812 = vmatpush1.msra.mxu0 0.0
  %1813 = vmatprep.subr.mxu0 0.0
  %1814 = vmatpush1.msra.mxu0 0.0
  %1815 = vmatprep.subr.mxu0 0.0
  %1816 = vmatpush1.msra.mxu0 0.0
  %1817 = vmatprep.subr.mxu0 0.0
  %1818 = vmatpush1.msra.mxu0 0.0
  %1819 = vmatprep.subr.mxu0 0.0
  %1820 = vmatpush1.msra.mxu0 0.0
  %1821 = vmatprep.subr.mxu0 0.0
  %1822 = vmatpush1.msra.mxu0 0.0
  %1823 = vmatprep.subr.mxu0 0.0
  %1824 = vmatpush1.msra.mxu0 0.0
  %1825 = vmatprep.subr.mxu0 0.0
  %1826 = vmatpush1.msra.mxu0 0.0
  %1827 = vmatprep.subr.mxu0 0.0
  %1828 = vmatpush1.msra.mxu0 0.0
  %1829 = vmatprep.subr.mxu0 0.0
  %1830 = vmatpush1.msra.mxu0 0.0
  %1831 = vmatprep.subr.mxu0 0.0
  %1832 = vmatpush1.msra.mxu0 0.0
  %1833 = vmatprep.subr.mxu0 0.0
  %1834 = vmatpush1.msra.mxu0 0.0
  %1835 = vmatprep.subr.mxu0 0.0
  %1836 = vmatpush1.msra.mxu0 0.0
  %1837 = vmatprep.subr.mxu0 0.0
  %1838 = vmatpush1.msra.mxu0 0.0
  %1839 = vmatprep.mubr.f32.mxu0 0.0
  %1840 = vmatmul.mubr.f32.gmra.mrb[0].mxu0 %v1698
  %v1841 = vpop.f32.mrb[0].mxu0
  %v1842 = vadd.f32 0.0, %v1841
  %v1843 = vpop.f32.mrb[0].mxu0
  %v1844 = vadd.f32 0.0, %v1843
  %1845 = vdwg.mxu0
  %v1846 = vadd.f32 %v1700, %v1771
  %v1847 = vadd.f32 %v1701, %v1773
  %v1848 = vadd.f32 %v1702, %v1842
  %v1849 = vadd.f32 %v1703, %v1844
  %v1850 = vadd.f32 %v1846, %v364
  %v1851 = vadd.f32 %v1847, %v368
  %v1852 = vadd.f32 %v1848, %v372
  %v1853 = vadd.f32 %v1849, %v376
  %v1854 = vxor.u32 %v1850, 2147483648
  %v1855 = vmul.f32 %v1854, 1.442695
  %v1856 = vpow.pop %v1855
  %v1857 = vadd.f32 %v1856, 1.0
  %v1858 = vrcp.pop %v1857
  %v1859 = vmul.f32 1.0, %v1858
  %v1860 = vxor.u32 %v1851, 2147483648
  %v1861 = vmul.f32 %v1860, 1.442695
  %v1862 = vpow.pop %v1861
  %v1863 = vadd.f32 %v1862, 1.0
  %v1864 = vrcp.pop %v1863
  %v1865 = vmul.f32 1.0, %v1864
  %v1866 = vtanh.pop %v1852
  %v1867 = vxor.u32 %v1853, 2147483648
  %v1868 = vmul.f32 %v1867, 1.442695
  %v1869 = vpow.pop %v1868
  %v1870 = vadd.f32 %v1869, 1.0
  %v1871 = vrcp.pop %v1870
  %v1872 = vmul.f32 1.0, %v1871
  %v1873 = vmul.f32 %v1865, %v1696
  %v1874 = vmul.f32 %v1859, %v1866
  %v1875 = vadd.f32 %v1873, %v1874
  %v1876 = vtanh.pop %v1875
  %v1877 = vmul.f32 %v1872, %v1876
  %1878 = vst [vmem:[#allocation2] sm:$0xff] %v1877
  %1879 = vst [vmem:[#allocation3] sm:$0xff] %v1875
  // Predicated region
  $region30: #{lstm_classifier.1} parent=0 // pred_check
    %p1880 = pneg %p23
  $region31: #{lstm_classifier.1} parent=0 // pred_check_branch
    %1882 = sbr.rel (%p1880) target = $region33
  $region32: #{lstm_classifier.1} parent=0 // pred_region
    %v1883 = vld [vmem:[%s4] sm:$0xff]
    %v1884 = vld [vmem:[%s4 + $0x8] sm:$0xff]
    %v1885 = vld [vmem:[%s4 + $0x10] sm:$0xff]
    %v1886 = vld [vmem:[%s4 + $0x18] sm:$0xff]
    %v1887 = vld [vmem:[%s4 + $0x20] sm:$0xff]
    %v1888 = vld [vmem:[%s4 + $0x28] sm:$0xff]
    %v1889 = vld [vmem:[%s4 + $0x30] sm:$0xff]
    %v1890 = vld [vmem:[%s4 + $0x38] sm:$0xff]
    %v1891 = vld [vmem:[%s4 + $0x40] sm:$0xff]
    %v1892 = vld [vmem:[%s4 + $0x48] sm:$0xff]
    %v1893 = vld [vmem:[%s4 + $0x50] sm:$0xff]
    %v1894 = vld [vmem:[%s4 + $0x58] sm:$0xff]
    %v1895 = vld [vmem:[%s4 + $0x60] sm:$0xff]
    %v1896 = vld [vmem:[%s4 + $0x68] sm:$0xff]
    %v1897 = vld [vmem:[%s4 + $0x70] sm:$0xff]
    %v1898 = vld [vmem:[%s4 + $0x78] sm:$0xff]
    %v1899 = vld [vmem:[%s5] sm:$0x1]
    %v1901 = vlaneseq
    %v1902 = vshrl.u32 %v1901, 7
    %v1903 = vsub.s32 0, %v1902
    %v1904 = vrot.slane %v1899, %v1903
    %1906 = vmatprep.subr.mxu0 0.0
    %1907 = vmatpush1.msra.mxu0 %v1883
    %1908 = vmatprep.subr.mxu0 0.0
    %1909 = vmatpush1.msra.mxu0 %v1884
    %1910 = vmatprep.subr.mxu0 0.0
    %1911 = vmatpush1.msra.mxu0 %v1885
    %1912 = vmatprep.subr.mxu0 0.0
    %1913 = vmatpush1.msra.mxu0 %v1886
    %1914 = vmatprep.subr.mxu0 0.0
    %1915 = vmatpush1.msra.mxu0 %v1887
    %1916 = vmatprep.subr.mxu0 0.0
    %1917 = vmatpush1.msra.mxu0 %v1888
    %1918 = vmatprep.subr.mxu0 0.0
    %1919 = vmatpush1.msra.mxu0 %v1889
    %1920 = vmatprep.subr.mxu0 0.0
    %1921 = vmatpush1.msra.mxu0 %v1890
    %1922 = vmatprep.subr.mxu0 0.0
    %1923 = vmatpush1.msra.mxu0 %v1891
    %1924 = vmatprep.subr.mxu0 0.0
    %1925 = vmatpush1.msra.mxu0 %v1892
    %1926 = vmatprep.subr.mxu0 0.0
    %1927 = vmatpush1.msra.mxu0 %v1893
    %1928 = vmatprep.subr.mxu0 0.0
    %1929 = vmatpush1.msra.mxu0 %v1894
    %1930 = vmatprep.subr.mxu0 0.0
    %1931 = vmatpush1.msra.mxu0 %v1895
    %1932 = vmatprep.subr.mxu0 0.0
    %1933 = vmatpush1.msra.mxu0 %v1896
    %1934 = vmatprep.subr.mxu0 0.0
    %1935 = vmatpush1.msra.mxu0 %v1897
    %1936 = vmatprep.subr.mxu0 0.0
    %1937 = vmatpush1.msra.mxu0 %v1898
    %1938 = vmatprep.subr.mxu0 0.0
    %1939 = vmatpush1.msra.mxu0 0.0
    %1940 = vmatprep.subr.mxu0 0.0
    %1941 = vmatpush1.msra.mxu0 0.0
    %1942 = vmatprep.subr.mxu0 0.0
    %1943 = vmatpush1.msra.mxu0 0.0
    %1944 = vmatprep.subr.mxu0 0.0
    %1945 = vmatpush1.msra.mxu0 0.0
    %1946 = vmatprep.subr.mxu0 0.0
    %1947 = vmatpush1.msra.mxu0 0.0
    %1948 = vmatprep.subr.mxu0 0.0
    %1949 = vmatpush1.msra.mxu0 0.0
    %1950 = vmatprep.subr.mxu0 0.0
    %1951 = vmatpush1.msra.mxu0 0.0
    %1952 = vmatprep.subr.mxu0 0.0
    %1953 = vmatpush1.msra.mxu0 0.0
    %1954 = vmatprep.subr.mxu0 0.0
    %1955 = vmatpush1.msra.mxu0 0.0
    %1956 = vmatprep.subr.mxu0 0.0
    %1957 = vmatpush1.msra.mxu0 0.0
    %1958 = vmatprep.subr.mxu0 0.0
    %1959 = vmatpush1.msra.mxu0 0.0
    %1960 = vmatprep.subr.mxu0 0.0
    %1961 = vmatpush1.msra.mxu0 0.0
    %1962 = vmatprep.subr.mxu0 0.0
    %1963 = vmatpush1.msra.mxu0 0.0
    %1964 = vmatprep.subr.mxu0 0.0
    %1965 = vmatpush1.msra.mxu0 0.0
    %1966 = vmatprep.subr.mxu0 0.0
    %1967 = vmatpush1.msra.mxu0 0.0
    %1968 = vmatprep.subr.mxu0 0.0
    %1969 = vmatpush1.msra.mxu0 0.0
    %1970 = vmatprep.mubr.f32.mxu0 0.0
    %1971 = vmatmul.mubr.f32.gmra.mrb[0].mxu0 %v1877
    %v1972 = vpop.f32.mrb[0].mxu0
    %v1973 = vadd.f32 %v1904, %v1972
    %v1974 = vpop.f32.mrb[0].mxu0
    %1975 = vdwg.mxu0
    %1976 = vst [vmem:[%s6] sm:$0xff] %v1973
  $region33: #{lstm_classifier.1} parent=0 // pred_fallthru
    _
  // Predicated region
  $region34: #{lstm_classifier.1} parent=0 // pred_check
    _
  $region35: #{lstm_classifier.1} parent=0 // pred_check_branch
    %1978 = sbr.rel (0) target = $region37
  $region36: #{lstm_classifier.1} parent=0 // pred_region
    _
  $region37: #{lstm_classifier.1} parent=0 // pred_fallthru
    _
  // Predicated region
  $region38: #{lstm_classifier.1} parent=0 // pred_check
    _
  $region39: #{lstm_classifier.1} parent=0 // pred_check_branch
    %1980 = sbr.rel (0) target = $region41
  $region40: #{lstm_classifier.1} parent=0 // pred_region
    _
  $region41: #{lstm_classifier.1} parent=0 // pred_fallthru
    _

</llo_original>
